<compile_context>
chip_gen: v6e
topology: v6e:2x2x1
jax: 0.10.0
libtpu: 0.0.40
codegen_flags: <defaults>
</compile_context>

<pallas_src>
import jax
import jax.numpy as jnp
from jax import lax
from jax.experimental import pallas as pl
from jax.experimental.pallas import tpu as pltpu

OUTPUT_DIM = 6
N_POS = 25            # 5x5 valid-conv output positions (input is 7x7)
K_RAW = 49 * 9        # 441 im2col features
K_PAD = 512           # lane-aligned K
EPS = 1e-5


# ------------------------------ fused kernel ------------------------------

def _fused_kernel(p_ref, wc_ref, gamma_ref, beta_ref,
                  w1_ref, b1_ref, w2_ref, b2_ref, w3_ref, b3_ref,
                  o_ref, y_sc, xf_sc):
    """conv2(as im2col matmul) + BN(batch stats) + ReLU + flatten + fc_loc + ReLU.

    p_ref:  (25*B, 512)  im2col patches, row = pos*B + b, K zero-padded
    wc_ref: (512, 32)    flattened conv weight (zero-padded rows)
    w1_ref: (800, 256)   fc1 weight, rows pre-permuted to (pos*32 + c) order
    w3_ref: (128, 128)   fc3 weight, zero-padded to 128 output lanes
    o_ref:  (B, 128)     lane-dense output; cols 6.. are zero, sliced off outside
    y_sc:   (25*B, 32)   VMEM scratch: conv/BN/ReLU activation
    xf_sc:  (B, 800)     VMEM scratch: flattened features
    """
    # --- conv2 as a single MXU matmul (no bias: it cancels under batch-stat BN)
    y = jnp.dot(p_ref[...], wc_ref[...], preferred_element_type=jnp.float32)

    # --- BatchNorm2d (training-mode batch stats over all B*5*5 rows), one pass
    n_inv = 1.0 / y.shape[0]
    mean = jnp.sum(y, axis=0, keepdims=True) * n_inv          # (1, 32)
    meansq = jnp.sum(y * y, axis=0, keepdims=True) * n_inv     # (1, 32)
    var = jnp.maximum(meansq - mean * mean, 0.0)
    scale = gamma_ref[...] * lax.rsqrt(var + EPS)
    shift = beta_ref[...] - mean * scale
    y_sc[...] = jnp.maximum(y * scale + shift, 0.0)            # BN + ReLU

    # --- flatten: xf[b, pos*32 + c] = act[pos*B + b, c]
    # (w1 rows were pre-permuted at init so this layout feeds fc1 directly)
    nb = o_ref.shape[0]
    n_pos = y_sc.shape[0] // nb
    for p in range(n_pos):
        xf_sc[:, p * 32:(p + 1) * 32] = y_sc[p * nb:(p + 1) * nb, :]

    # --- fc_loc: Linear(800,256)+ReLU, Linear(256,128)+ReLU, Linear(128,6pad)
    h = jnp.dot(xf_sc[...], w1_ref[...], preferred_element_type=jnp.float32)
    h = jnp.maximum(h + b1_ref[...], 0.0)
    h = jnp.dot(h, w2_ref[...], preferred_element_type=jnp.float32)
    h = jnp.maximum(h + b2_ref[...], 0.0)
    h = jnp.dot(h, w3_ref[...], preferred_element_type=jnp.float32)
    o_ref[...] = jnp.maximum(h + b3_ref[...], 0.0)             # final ReLU


def _full_spec(shape):
    n = len(shape)
    return pl.BlockSpec(shape, lambda *_, n=n: (0,) * n)


def fused_forward(patches, p):
    """patches: (25*B, K_PAD) -> (B, 128) padded output."""
    B = patches.shape[0] // N_POS
    out_shape = jax.ShapeDtypeStruct((B, 128), jnp.float32)
    args = (patches, p["wc"], p["gamma"], p["beta"],
            p["w1"], p["b1"], p["w2"], p["b2"], p["w3"], p["b3"])
    return pl.pallas_call(
        _fused_kernel,
        out_shape=out_shape,
        grid=(1,),
        in_specs=[_full_spec(a.shape) for a in args],
        out_specs=_full_spec(out_shape.shape),
        scratch_shapes=[pltpu.VMEM((N_POS * B, 32), jnp.float32),
                        pltpu.VMEM((B, 800), jnp.float32)],
        compiler_params=pltpu.CompilerParams(
            dimension_semantics=("arbitrary",)),
    )(*args)


# ------------------------------- glue (JAX) -------------------------------

def _im2col_3x3_valid(x):
    """x: (B, C, 7, 7) NCHW -> (25*B, K_PAD) patches.

    Row order = pos*B + b (spatial-major), column order = c*9 + kh*3 + kw,
    columns zero-padded 441 -> K_PAD.
    """
    B, C, H, W = x.shape
    OH, OW = H - 2, W - 2
    taps = [x[:, :, kh:kh + OH, kw:kw + OW] for kh in range(3) for kw in range(3)]
    pat = jnp.stack(taps, axis=2)                       # (B, C, 9, OH, OW)
    pat = pat.reshape(B, C * 9, OH * OW)                # cols c*9+t, pos h*5+w
    pat = pat.transpose(2, 0, 1).reshape(OH * OW * B, C * 9)   # row = pos*B + b
    return jnp.pad(pat, ((0, 0), (0, K_PAD - C * 9)))


def feature_regression_forward(x, params):
    """x: (B, 49, 7, 7) float32 NCHW. Returns (B, 6)."""
    patches = _im2col_3x3_valid(x)                      # (25*B, 512)
    out_pad = fused_forward(patches, params)            # (B, 128) lane-dense
    return out_pad[:, :OUTPUT_DIM]


def init_params(key, output_dim=OUTPUT_DIM):
    ks = jax.random.split(key, 5)

    def uniform(k, shape, fan_in):
        b = 1.0 / jnp.sqrt(fan_in)
        return jax.random.uniform(k, shape, jnp.float32, -b, b)

    # conv2: Conv2d(49, 32, 3).  Bias omitted on purpose: it cancels exactly
    # under training-mode BatchNorm (y - mean(y)).
    w_conv = jax.random.normal(ks[0], (32, 49, 3, 3), jnp.float32) * 0.05
    wc = w_conv.reshape(32, K_RAW).T                         # (441, 32)
    wc = jnp.pad(wc, ((0, K_PAD - K_RAW), (0, 0)))           # (512, 32)

    # bn2 affine (PyTorch default init)
    gamma = jnp.ones((1, 32), jnp.float32)
    beta = jnp.zeros((1, 32), jnp.float32)

    # fc_loc (weights stored as (in, out) = W.T)
    # w1 generated in PyTorch flatten order (row = c*25 + pos), then rows
    # permuted once to (pos*32 + c) order so the kernel flatten is direct.
    w1_pt = uniform(ks[1], (800, 256), 800.0)
    w1 = w1_pt.reshape(32, 25, 256).transpose(1, 0, 2).reshape(800, 256)
    b1 = uniform(ks[2], (1, 256), 800.0)
    w2 = uniform(ks[3], (256, 128), 256.0)
    b2 = uniform(ks[4], (1, 128), 256.0)

    # final layer (output_dim=6): weight zeroed, bias = identity affine, both
    # zero-padded to 128 output lanes for a lane-dense HBM store.
    w3 = jnp.zeros((128, 128), jnp.float32)
    b3 = jnp.zeros((1, 128), jnp.float32)
    b3 = b3.at[0, :6].set(jnp.array([1., 0., 0., 0., 1., 0.], jnp.float32))

    return {"wc": wc, "gamma": gamma, "beta": beta,
            "w1": w1, "b1": b1, "w2": w2, "b2": b2, "w3": w3, "b3": b3}


if __name__ == "__main__":
    key = jax.random.PRNGKey(0)
    kx, kp = jax.random.split(key)

    # fc_loc expects 800 = 32*5*5 features => 49-channel 7x7 input.
    B = 2
    x = jax.random.normal(kx, (B, 49, 7, 7), jnp.float32)
    params = init_params(kp)

    fwd = jax.jit(feature_regression_forward)
    out = jax.block_until_ready(fwd(x, params))
    assert out.shape == (B, OUTPUT_DIM) and out.dtype == jnp.float32
    assert bool(jnp.all(jnp.isfinite(out)))
    print("KERNEL_OK")
</pallas_src>

<mosaic_0001>
module attributes {stable_mosaic.version = 11 : i64} {
  func.func @_fused_kernel(%arg0: i32, %arg1: memref<50x512xf32, #tpu.memory_space<vmem>>, %arg2: memref<512x32xf32, #tpu.memory_space<vmem>>, %arg3: memref<1x32xf32, #tpu.memory_space<vmem>>, %arg4: memref<1x32xf32, #tpu.memory_space<vmem>>, %arg5: memref<800x256xf32, #tpu.memory_space<vmem>>, %arg6: memref<1x256xf32, #tpu.memory_space<vmem>>, %arg7: memref<256x128xf32, #tpu.memory_space<vmem>>, %arg8: memref<1x128xf32, #tpu.memory_space<vmem>>, %arg9: memref<128x128xf32, #tpu.memory_space<vmem>>, %arg10: memref<1x128xf32, #tpu.memory_space<vmem>>, %arg11: memref<2x128xf32, #tpu.memory_space<vmem>>, %arg12: memref<50x32xf32, #tpu.memory_space<vmem>>, %arg13: memref<2x800xf32, #tpu.memory_space<vmem>>) attributes {dimension_semantics = [#tpu.dimension_semantics<arbitrary>], iteration_bounds = array<i64: 1>, scalar_prefetch = 0 : i64, scratch_operands = 2 : i64, tpu.core_type = #tpu.core_type<tc>, window_params = [{pipeline_mode = #tpu.pipeline_mode<synchronous>, transform_indices = @transform_0, window_bounds = array<i64: 50, 512>}, {pipeline_mode = #tpu.pipeline_mode<synchronous>, transform_indices = @transform_1, window_bounds = array<i64: 512, 32>}, {pipeline_mode = #tpu.pipeline_mode<synchronous>, transform_indices = @transform_2, window_bounds = array<i64: 1, 32>}, {pipeline_mode = #tpu.pipeline_mode<synchronous>, transform_indices = @transform_3, window_bounds = array<i64: 1, 32>}, {pipeline_mode = #tpu.pipeline_mode<synchronous>, transform_indices = @transform_4, window_bounds = array<i64: 800, 256>}, {pipeline_mode = #tpu.pipeline_mode<synchronous>, transform_indices = @transform_5, window_bounds = array<i64: 1, 256>}, {pipeline_mode = #tpu.pipeline_mode<synchronous>, transform_indices = @transform_6, window_bounds = array<i64: 256, 128>}, {pipeline_mode = #tpu.pipeline_mode<synchronous>, transform_indices = @transform_7, window_bounds = array<i64: 1, 128>}, {pipeline_mode = #tpu.pipeline_mode<synchronous>, transform_indices = @transform_8, window_bounds = array<i64: 128, 128>}, {pipeline_mode = #tpu.pipeline_mode<synchronous>, transform_indices = @transform_9, window_bounds = array<i64: 1, 128>}, {pipeline_mode = #tpu.pipeline_mode<synchronous>, transform_indices = @transform_10, window_bounds = array<i64: 2, 128>}]} {
    %c0 = arith.constant 0 : index
    %c0_0 = arith.constant 0 : index
    %0 = vector.load %arg1[%c0, %c0_0] : memref<50x512xf32, #tpu.memory_space<vmem>>, vector<50x512xf32>
    %c0_1 = arith.constant 0 : index
    %c0_2 = arith.constant 0 : index
    %1 = vector.load %arg2[%c0_1, %c0_2] : memref<512x32xf32, #tpu.memory_space<vmem>>, vector<512x32xf32>
    %cst = arith.constant dense<0.000000e+00> : vector<50x32xf32>
    %2 = tpu.matmul %0, %1, %cst {dimension_numbers = #tpu.dot_dimension_numbers<[1], [0], [0], [1], [0, 0, 1, 1], [], []>} : vector<50x512xf32>, vector<512x32xf32>, vector<50x32xf32> -> vector<50x32xf32>
    %cst_3 = arith.constant dense<0.000000e+00> : vector<32xf32>
    %3 = vector.multi_reduction <add>, %2, %cst_3 [0] : vector<50x32xf32> to vector<32xf32>
    %4 = vector.shape_cast %3 : vector<32xf32> to vector<1x32xf32>
    %cst_4 = arith.constant 2.000000e-02 : f32
    %5 = vector.broadcast %cst_4 : f32 to vector<1x32xf32>
    %6 = arith.mulf %4, %5 : vector<1x32xf32>
    %7 = arith.mulf %2, %2 : vector<50x32xf32>
    %cst_5 = arith.constant dense<0.000000e+00> : vector<32xf32>
    %8 = vector.multi_reduction <add>, %7, %cst_5 [0] : vector<50x32xf32> to vector<32xf32>
    %9 = vector.shape_cast %8 : vector<32xf32> to vector<1x32xf32>
    %cst_6 = arith.constant 2.000000e-02 : f32
    %10 = vector.broadcast %cst_6 : f32 to vector<1x32xf32>
    %11 = arith.mulf %9, %10 : vector<1x32xf32>
    %12 = arith.mulf %6, %6 : vector<1x32xf32>
    %13 = arith.subf %11, %12 : vector<1x32xf32>
    %cst_7 = arith.constant 0.000000e+00 : f32
    %14 = vector.broadcast %cst_7 : f32 to vector<1x32xf32>
    %15 = arith.maximumf %13, %14 : vector<1x32xf32>
    %c0_8 = arith.constant 0 : index
    %c0_9 = arith.constant 0 : index
    %16 = vector.load %arg3[%c0_8, %c0_9] : memref<1x32xf32, #tpu.memory_space<vmem>>, vector<1x32xf32>
    %cst_10 = arith.constant 9.99999974E-6 : f32
    %17 = vector.broadcast %cst_10 : f32 to vector<1x32xf32>
    %18 = arith.addf %15, %17 : vector<1x32xf32>
    %19 = math.rsqrt %18 : vector<1x32xf32>
    %20 = arith.mulf %16, %19 : vector<1x32xf32>
    %c0_11 = arith.constant 0 : index
    %c0_12 = arith.constant 0 : index
    %21 = vector.load %arg4[%c0_11, %c0_12] : memref<1x32xf32, #tpu.memory_space<vmem>>, vector<1x32xf32>
    %22 = arith.mulf %6, %20 : vector<1x32xf32>
    %23 = arith.subf %21, %22 : vector<1x32xf32>
    %24 = vector.broadcast %20 : vector<1x32xf32> to vector<50x32xf32>
    %25 = arith.mulf %2, %24 : vector<50x32xf32>
    %26 = vector.broadcast %23 : vector<1x32xf32> to vector<50x32xf32>
    %27 = arith.addf %25, %26 : vector<50x32xf32>
    %cst_13 = arith.constant 0.000000e+00 : f32
    %28 = vector.broadcast %cst_13 : f32 to vector<50x32xf32>
    %29 = arith.maximumf %27, %28 : vector<50x32xf32>
    %c0_14 = arith.constant 0 : index
    %c0_15 = arith.constant 0 : index
    %30 = vector.load %arg12[%c0_14, %c0_15] : memref<50x32xf32, #tpu.memory_space<vmem>>, vector<50x32xf32>
    tpu.vector_store %arg12[%c0_14, %c0_15], %29 {strides = array<i32>} : memref<50x32xf32, #tpu.memory_space<vmem>>, vector<50x32xf32>,
    %c0_16 = arith.constant 0 : index
    %c0_17 = arith.constant 0 : index
    %31 = vector.load %arg12[%c0_16, %c0_17] : memref<50x32xf32, #tpu.memory_space<vmem>>, vector<2x32xf32>
    %c0_18 = arith.constant 0 : index
    %c0_19 = arith.constant 0 : index
    %32 = vector.load %arg13[%c0_18, %c0_19] : memref<2x800xf32, #tpu.memory_space<vmem>>, vector<2x32xf32>
    tpu.vector_store %arg13[%c0_18, %c0_19], %31 {strides = array<i32>} : memref<2x800xf32, #tpu.memory_space<vmem>>, vector<2x32xf32>,
    %c2 = arith.constant 2 : index
    %c0_20 = arith.constant 0 : index
    %33 = vector.load %arg12[%c2, %c0_20] : memref<50x32xf32, #tpu.memory_space<vmem>>, vector<2x32xf32>
    %c0_21 = arith.constant 0 : index
    %c32 = arith.constant 32 : index
    %34 = vector.load %arg13[%c0_21, %c32] : memref<2x800xf32, #tpu.memory_space<vmem>>, vector<2x32xf32>
    tpu.vector_store %arg13[%c0_21, %c32], %33 {strides = array<i32>} : memref<2x800xf32, #tpu.memory_space<vmem>>, vector<2x32xf32>,
    %c4 = arith.constant 4 : index
    %c0_22 = arith.constant 0 : index
    %35 = vector.load %arg12[%c4, %c0_22] : memref<50x32xf32, #tpu.memory_space<vmem>>, vector<2x32xf32>
    %c0_23 = arith.constant 0 : index
    %c64 = arith.constant 64 : index
    %36 = vector.load %arg13[%c0_23, %c64] : memref<2x800xf32, #tpu.memory_space<vmem>>, vector<2x32xf32>
    tpu.vector_store %arg13[%c0_23, %c64], %35 {strides = array<i32>} : memref<2x800xf32, #tpu.memory_space<vmem>>, vector<2x32xf32>,
    %c6 = arith.constant 6 : index
    %c0_24 = arith.constant 0 : index
    %37 = vector.load %arg12[%c6, %c0_24] : memref<50x32xf32, #tpu.memory_space<vmem>>, vector<2x32xf32>
    %c0_25 = arith.constant 0 : index
    %c96 = arith.constant 96 : index
    %38 = vector.load %arg13[%c0_25, %c96] : memref<2x800xf32, #tpu.memory_space<vmem>>, vector<2x32xf32>
    tpu.vector_store %arg13[%c0_25, %c96], %37 {strides = array<i32>} : memref<2x800xf32, #tpu.memory_space<vmem>>, vector<2x32xf32>,
    %c8 = arith.constant 8 : index
    %c0_26 = arith.constant 0 : index
    %39 = vector.load %arg12[%c8, %c0_26] : memref<50x32xf32, #tpu.memory_space<vmem>>, vector<2x32xf32>
    %c0_27 = arith.constant 0 : index
    %c128 = arith.constant 128 : index
    %40 = vector.load %arg13[%c0_27, %c128] : memref<2x800xf32, #tpu.memory_space<vmem>>, vector<2x32xf32>
    tpu.vector_store %arg13[%c0_27, %c128], %39 {strides = array<i32>} : memref<2x800xf32, #tpu.memory_space<vmem>>, vector<2x32xf32>,
    %c10 = arith.constant 10 : index
    %c0_28 = arith.constant 0 : index
    %41 = vector.load %arg12[%c10, %c0_28] : memref<50x32xf32, #tpu.memory_space<vmem>>, vector<2x32xf32>
    %c0_29 = arith.constant 0 : index
    %c160 = arith.constant 160 : index
    %42 = vector.load %arg13[%c0_29, %c160] : memref<2x800xf32, #tpu.memory_space<vmem>>, vector<2x32xf32>
    tpu.vector_store %arg13[%c0_29, %c160], %41 {strides = array<i32>} : memref<2x800xf32, #tpu.memory_space<vmem>>, vector<2x32xf32>,
    %c12 = arith.constant 12 : index
    %c0_30 = arith.constant 0 : index
    %43 = vector.load %arg12[%c12, %c0_30] : memref<50x32xf32, #tpu.memory_space<vmem>>, vector<2x32xf32>
    %c0_31 = arith.constant 0 : index
    %c192 = arith.constant 192 : index
    %44 = vector.load %arg13[%c0_31, %c192] : memref<2x800xf32, #tpu.memory_space<vmem>>, vector<2x32xf32>
    tpu.vector_store %arg13[%c0_31, %c192], %43 {strides = array<i32>} : memref<2x800xf32, #tpu.memory_space<vmem>>, vector<2x32xf32>,
    %c14 = arith.constant 14 : index
    %c0_32 = arith.constant 0 : index
    %45 = vector.load %arg12[%c14, %c0_32] : memref<50x32xf32, #tpu.memory_space<vmem>>, vector<2x32xf32>
    %c0_33 = arith.constant 0 : index
    %c224 = arith.constant 224 : index
    %46 = vector.load %arg13[%c0_33, %c224] : memref<2x800xf32, #tpu.memory_space<vmem>>, vector<2x32xf32>
    tpu.vector_store %arg13[%c0_33, %c224], %45 {strides = array<i32>} : memref<2x800xf32, #tpu.memory_space<vmem>>, vector<2x32xf32>,
    %c16 = arith.constant 16 : index
    %c0_34 = arith.constant 0 : index
    %47 = vector.load %arg12[%c16, %c0_34] : memref<50x32xf32, #tpu.memory_space<vmem>>, vector<2x32xf32>
    %c0_35 = arith.constant 0 : index
    %c256 = arith.constant 256 : index
    %48 = vector.load %arg13[%c0_35, %c256] : memref<2x800xf32, #tpu.memory_space<vmem>>, vector<2x32xf32>
    tpu.vector_store %arg13[%c0_35, %c256], %47 {strides = array<i32>} : memref<2x800xf32, #tpu.memory_space<vmem>>, vector<2x32xf32>,
    %c18 = arith.constant 18 : index
    %c0_36 = arith.constant 0 : index
    %49 = vector.load %arg12[%c18, %c0_36] : memref<50x32xf32, #tpu.memory_space<vmem>>, vector<2x32xf32>
    %c0_37 = arith.constant 0 : index
    %c288 = arith.constant 288 : index
    %50 = vector.load %arg13[%c0_37, %c288] : memref<2x800xf32, #tpu.memory_space<vmem>>, vector<2x32xf32>
    tpu.vector_store %arg13[%c0_37, %c288], %49 {strides = array<i32>} : memref<2x800xf32, #tpu.memory_space<vmem>>, vector<2x32xf32>,
    %c20 = arith.constant 20 : index
    %c0_38 = arith.constant 0 : index
    %51 = vector.load %arg12[%c20, %c0_38] : memref<50x32xf32, #tpu.memory_space<vmem>>, vector<2x32xf32>
    %c0_39 = arith.constant 0 : index
    %c320 = arith.constant 320 : index
    %52 = vector.load %arg13[%c0_39, %c320] : memref<2x800xf32, #tpu.memory_space<vmem>>, vector<2x32xf32>
    tpu.vector_store %arg13[%c0_39, %c320], %51 {strides = array<i32>} : memref<2x800xf32, #tpu.memory_space<vmem>>, vector<2x32xf32>,
    %c22 = arith.constant 22 : index
    %c0_40 = arith.constant 0 : index
    %53 = vector.load %arg12[%c22, %c0_40] : memref<50x32xf32, #tpu.memory_space<vmem>>, vector<2x32xf32>
    %c0_41 = arith.constant 0 : index
    %c352 = arith.constant 352 : index
    %54 = vector.load %arg13[%c0_41, %c352] : memref<2x800xf32, #tpu.memory_space<vmem>>, vector<2x32xf32>
    tpu.vector_store %arg13[%c0_41, %c352], %53 {strides = array<i32>} : memref<2x800xf32, #tpu.memory_space<vmem>>, vector<2x32xf32>,
    %c24 = arith.constant 24 : index
    %c0_42 = arith.constant 0 : index
    %55 = vector.load %arg12[%c24, %c0_42] : memref<50x32xf32, #tpu.memory_space<vmem>>, vector<2x32xf32>
    %c0_43 = arith.constant 0 : index
    %c384 = arith.constant 384 : index
    %56 = vector.load %arg13[%c0_43, %c384] : memref<2x800xf32, #tpu.memory_space<vmem>>, vector<2x32xf32>
    tpu.vector_store %arg13[%c0_43, %c384], %55 {strides = array<i32>} : memref<2x800xf32, #tpu.memory_space<vmem>>, vector<2x32xf32>,
    %c26 = arith.constant 26 : index
    %c0_44 = arith.constant 0 : index
    %57 = vector.load %arg12[%c26, %c0_44] : memref<50x32xf32, #tpu.memory_space<vmem>>, vector<2x32xf32>
    %c0_45 = arith.constant 0 : index
    %c416 = arith.constant 416 : index
    %58 = vector.load %arg13[%c0_45, %c416] : memref<2x800xf32, #tpu.memory_space<vmem>>, vector<2x32xf32>
    tpu.vector_store %arg13[%c0_45, %c416], %57 {strides = array<i32>} : memref<2x800xf32, #tpu.memory_space<vmem>>, vector<2x32xf32>,
    %c28 = arith.constant 28 : index
    %c0_46 = arith.constant 0 : index
    %59 = vector.load %arg12[%c28, %c0_46] : memref<50x32xf32, #tpu.memory_space<vmem>>, vector<2x32xf32>
    %c0_47 = arith.constant 0 : index
    %c448 = arith.constant 448 : index
    %60 = vector.load %arg13[%c0_47, %c448] : memref<2x800xf32, #tpu.memory_space<vmem>>, vector<2x32xf32>
    tpu.vector_store %arg13[%c0_47, %c448], %59 {strides = array<i32>} : memref<2x800xf32, #tpu.memory_space<vmem>>, vector<2x32xf32>,
    %c30 = arith.constant 30 : index
    %c0_48 = arith.constant 0 : index
    %61 = vector.load %arg12[%c30, %c0_48] : memref<50x32xf32, #tpu.memory_space<vmem>>, vector<2x32xf32>
    %c0_49 = arith.constant 0 : index
    %c480 = arith.constant 480 : index
    %62 = vector.load %arg13[%c0_49, %c480] : memref<2x800xf32, #tpu.memory_space<vmem>>, vector<2x32xf32>
    tpu.vector_store %arg13[%c0_49, %c480], %61 {strides = array<i32>} : memref<2x800xf32, #tpu.memory_space<vmem>>, vector<2x32xf32>,
    %c32_50 = arith.constant 32 : index
    %c0_51 = arith.constant 0 : index
    %63 = vector.load %arg12[%c32_50, %c0_51] : memref<50x32xf32, #tpu.memory_space<vmem>>, vector<2x32xf32>
    %c0_52 = arith.constant 0 : index
    %c512 = arith.constant 512 : index
    %64 = vector.load %arg13[%c0_52, %c512] : memref<2x800xf32, #tpu.memory_space<vmem>>, vector<2x32xf32>
    tpu.vector_store %arg13[%c0_52, %c512], %63 {strides = array<i32>} : memref<2x800xf32, #tpu.memory_space<vmem>>, vector<2x32xf32>,
    %c34 = arith.constant 34 : index
    %c0_53 = arith.constant 0 : index
    %65 = vector.load %arg12[%c34, %c0_53] : memref<50x32xf32, #tpu.memory_space<vmem>>, vector<2x32xf32>
    %c0_54 = arith.constant 0 : index
    %c544 = arith.constant 544 : index
    %66 = vector.load %arg13[%c0_54, %c544] : memref<2x800xf32, #tpu.memory_space<vmem>>, vector<2x32xf32>
    tpu.vector_store %arg13[%c0_54, %c544], %65 {strides = array<i32>} : memref<2x800xf32, #tpu.memory_space<vmem>>, vector<2x32xf32>,
    %c36 = arith.constant 36 : index
    %c0_55 = arith.constant 0 : index
    %67 = vector.load %arg12[%c36, %c0_55] : memref<50x32xf32, #tpu.memory_space<vmem>>, vector<2x32xf32>
    %c0_56 = arith.constant 0 : index
    %c576 = arith.constant 576 : index
    %68 = vector.load %arg13[%c0_56, %c576] : memref<2x800xf32, #tpu.memory_space<vmem>>, vector<2x32xf32>
    tpu.vector_store %arg13[%c0_56, %c576], %67 {strides = array<i32>} : memref<2x800xf32, #tpu.memory_space<vmem>>, vector<2x32xf32>,
    %c38 = arith.constant 38 : index
    %c0_57 = arith.constant 0 : index
    %69 = vector.load %arg12[%c38, %c0_57] : memref<50x32xf32, #tpu.memory_space<vmem>>, vector<2x32xf32>
    %c0_58 = arith.constant 0 : index
    %c608 = arith.constant 608 : index
    %70 = vector.load %arg13[%c0_58, %c608] : memref<2x800xf32, #tpu.memory_space<vmem>>, vector<2x32xf32>
    tpu.vector_store %arg13[%c0_58, %c608], %69 {strides = array<i32>} : memref<2x800xf32, #tpu.memory_space<vmem>>, vector<2x32xf32>,
    %c40 = arith.constant 40 : index
    %c0_59 = arith.constant 0 : index
    %71 = vector.load %arg12[%c40, %c0_59] : memref<50x32xf32, #tpu.memory_space<vmem>>, vector<2x32xf32>
    %c0_60 = arith.constant 0 : index
    %c640 = arith.constant 640 : index
    %72 = vector.load %arg13[%c0_60, %c640] : memref<2x800xf32, #tpu.memory_space<vmem>>, vector<2x32xf32>
    tpu.vector_store %arg13[%c0_60, %c640], %71 {strides = array<i32>} : memref<2x800xf32, #tpu.memory_space<vmem>>, vector<2x32xf32>,
    %c42 = arith.constant 42 : index
    %c0_61 = arith.constant 0 : index
    %73 = vector.load %arg12[%c42, %c0_61] : memref<50x32xf32, #tpu.memory_space<vmem>>, vector<2x32xf32>
    %c0_62 = arith.constant 0 : index
    %c672 = arith.constant 672 : index
    %74 = vector.load %arg13[%c0_62, %c672] : memref<2x800xf32, #tpu.memory_space<vmem>>, vector<2x32xf32>
    tpu.vector_store %arg13[%c0_62, %c672], %73 {strides = array<i32>} : memref<2x800xf32, #tpu.memory_space<vmem>>, vector<2x32xf32>,
    %c44 = arith.constant 44 : index
    %c0_63 = arith.constant 0 : index
    %75 = vector.load %arg12[%c44, %c0_63] : memref<50x32xf32, #tpu.memory_space<vmem>>, vector<2x32xf32>
    %c0_64 = arith.constant 0 : index
    %c704 = arith.constant 704 : index
    %76 = vector.load %arg13[%c0_64, %c704] : memref<2x800xf32, #tpu.memory_space<vmem>>, vector<2x32xf32>
    tpu.vector_store %arg13[%c0_64, %c704], %75 {strides = array<i32>} : memref<2x800xf32, #tpu.memory_space<vmem>>, vector<2x32xf32>,
    %c46 = arith.constant 46 : index
    %c0_65 = arith.constant 0 : index
    %77 = vector.load %arg12[%c46, %c0_65] : memref<50x32xf32, #tpu.memory_space<vmem>>, vector<2x32xf32>
    %c0_66 = arith.constant 0 : index
    %c736 = arith.constant 736 : index
    %78 = vector.load %arg13[%c0_66, %c736] : memref<2x800xf32, #tpu.memory_space<vmem>>, vector<2x32xf32>
    tpu.vector_store %arg13[%c0_66, %c736], %77 {strides = array<i32>} : memref<2x800xf32, #tpu.memory_space<vmem>>, vector<2x32xf32>,
    %c48 = arith.constant 48 : index
    %c0_67 = arith.constant 0 : index
    %79 = vector.load %arg12[%c48, %c0_67] : memref<50x32xf32, #tpu.memory_space<vmem>>, vector<2x32xf32>
    %c0_68 = arith.constant 0 : index
    %c768 = arith.constant 768 : index
    %80 = vector.load %arg13[%c0_68, %c768] : memref<2x800xf32, #tpu.memory_space<vmem>>, vector<2x32xf32>
    tpu.vector_store %arg13[%c0_68, %c768], %79 {strides = array<i32>} : memref<2x800xf32, #tpu.memory_space<vmem>>, vector<2x32xf32>,
    %c0_69 = arith.constant 0 : index
    %c0_70 = arith.constant 0 : index
    %81 = vector.load %arg13[%c0_69, %c0_70] : memref<2x800xf32, #tpu.memory_space<vmem>>, vector<2x800xf32>
    %c0_71 = arith.constant 0 : index
    %c0_72 = arith.constant 0 : index
    %82 = vector.load %arg5[%c0_71, %c0_72] : memref<800x256xf32, #tpu.memory_space<vmem>>, vector<800x256xf32>
    %cst_73 = arith.constant dense<0.000000e+00> : vector<2x256xf32>
    %83 = tpu.matmul %81, %82, %cst_73 {dimension_numbers = #tpu.dot_dimension_numbers<[1], [0], [0], [1], [0, 0, 1, 1], [], []>} : vector<2x800xf32>, vector<800x256xf32>, vector<2x256xf32> -> vector<2x256xf32>
    %c0_74 = arith.constant 0 : index
    %c0_75 = arith.constant 0 : index
    %84 = vector.load %arg6[%c0_74, %c0_75] : memref<1x256xf32, #tpu.memory_space<vmem>>, vector<1x256xf32>
    %85 = vector.broadcast %84 : vector<1x256xf32> to vector<2x256xf32>
    %86 = arith.addf %83, %85 : vector<2x256xf32>
    %cst_76 = arith.constant 0.000000e+00 : f32
    %87 = vector.broadcast %cst_76 : f32 to vector<2x256xf32>
    %88 = arith.maximumf %86, %87 : vector<2x256xf32>
    %c0_77 = arith.constant 0 : index
    %c0_78 = arith.constant 0 : index
    %89 = vector.load %arg7[%c0_77, %c0_78] : memref<256x128xf32, #tpu.memory_space<vmem>>, vector<256x128xf32>
    %cst_79 = arith.constant dense<0.000000e+00> : vector<2x128xf32>
    %90 = tpu.matmul %88, %89, %cst_79 {dimension_numbers = #tpu.dot_dimension_numbers<[1], [0], [0], [1], [0, 0, 1, 1], [], []>} : vector<2x256xf32>, vector<256x128xf32>, vector<2x128xf32> -> vector<2x128xf32>
    %c0_80 = arith.constant 0 : index
    %c0_81 = arith.constant 0 : index
    %91 = vector.load %arg8[%c0_80, %c0_81] : memref<1x128xf32, #tpu.memory_space<vmem>>, vector<1x128xf32>
    %92 = vector.broadcast %91 : vector<1x128xf32> to vector<2x128xf32>
    %93 = arith.addf %90, %92 : vector<2x128xf32>
    %cst_82 = arith.constant 0.000000e+00 : f32
    %94 = vector.broadcast %cst_82 : f32 to vector<2x128xf32>
    %95 = arith.maximumf %93, %94 : vector<2x128xf32>
    %c0_83 = arith.constant 0 : index
    %c0_84 = arith.constant 0 : index
    %96 = vector.load %arg9[%c0_83, %c0_84] : memref<128x128xf32, #tpu.memory_space<vmem>>, vector<128x128xf32>
    %cst_85 = arith.constant dense<0.000000e+00> : vector<2x128xf32>
    %97 = tpu.matmul %95, %96, %cst_85 {dimension_numbers = #tpu.dot_dimension_numbers<[1], [0], [0], [1], [0, 0, 1, 1], [], []>} : vector<2x128xf32>, vector<128x128xf32>, vector<2x128xf32> -> vector<2x128xf32>
    %c0_86 = arith.constant 0 : index
    %c0_87 = arith.constant 0 : index
    %98 = vector.load %arg10[%c0_86, %c0_87] : memref<1x128xf32, #tpu.memory_space<vmem>>, vector<1x128xf32>
    %99 = vector.broadcast %98 : vector<1x128xf32> to vector<2x128xf32>
    %100 = arith.addf %97, %99 : vector<2x128xf32>
    %cst_88 = arith.constant 0.000000e+00 : f32
    %101 = vector.broadcast %cst_88 : f32 to vector<2x128xf32>
    %102 = arith.maximumf %100, %101 : vector<2x128xf32>
    %c0_89 = arith.constant 0 : index
    %c0_90 = arith.constant 0 : index
    %103 = vector.load %arg11[%c0_89, %c0_90] : memref<2x128xf32, #tpu.memory_space<vmem>>, vector<2x128xf32>
    tpu.vector_store %arg11[%c0_89, %c0_90], %102 {strides = array<i32>} : memref<2x128xf32, #tpu.memory_space<vmem>>, vector<2x128xf32>,
    return
  }
  func.func @transform_0(%arg0: i32) -> (i32, i32) {
    %c0_i32 = arith.constant 0 : i32
    %c0_i32_0 = arith.constant 0 : i32
    %c0_i32_1 = arith.constant 0 : i32
    return %c0_i32, %c0_i32_0 : i32, i32
  }
  func.func @transform_1(%arg0: i32) -> (i32, i32) {
    %c0_i32 = arith.constant 0 : i32
    %c0_i32_0 = arith.constant 0 : i32
    %c0_i32_1 = arith.constant 0 : i32
    return %c0_i32, %c0_i32_0 : i32, i32
  }
  func.func @transform_2(%arg0: i32) -> (i32, i32) {
    %c0_i32 = arith.constant 0 : i32
    %c0_i32_0 = arith.constant 0 : i32
    %c0_i32_1 = arith.constant 0 : i32
    return %c0_i32, %c0_i32_0 : i32, i32
  }
  func.func @transform_3(%arg0: i32) -> (i32, i32) {
    %c0_i32 = arith.constant 0 : i32
    %c0_i32_0 = arith.constant 0 : i32
    %c0_i32_1 = arith.constant 0 : i32
    return %c0_i32, %c0_i32_0 : i32, i32
  }
  func.func @transform_4(%arg0: i32) -> (i32, i32) {
    %c0_i32 = arith.constant 0 : i32
    %c0_i32_0 = arith.constant 0 : i32
    %c0_i32_1 = arith.constant 0 : i32
    return %c0_i32, %c0_i32_0 : i32, i32
  }
  func.func @transform_5(%arg0: i32) -> (i32, i32) {
    %c0_i32 = arith.constant 0 : i32
    %c0_i32_0 = arith.constant 0 : i32
    %c0_i32_1 = arith.constant 0 : i32
    return %c0_i32, %c0_i32_0 : i32, i32
  }
  func.func @transform_6(%arg0: i32) -> (i32, i32) {
    %c0_i32 = arith.constant 0 : i32
    %c0_i32_0 = arith.constant 0 : i32
    %c0_i32_1 = arith.constant 0 : i32
    return %c0_i32, %c0_i32_0 : i32, i32
  }
  func.func @transform_7(%arg0: i32) -> (i32, i32) {
    %c0_i32 = arith.constant 0 : i32
    %c0_i32_0 = arith.constant 0 : i32
    %c0_i32_1 = arith.constant 0 : i32
    return %c0_i32, %c0_i32_0 : i32, i32
  }
  func.func @transform_8(%arg0: i32) -> (i32, i32) {
    %c0_i32 = arith.constant 0 : i32
    %c0_i32_0 = arith.constant 0 : i32
    %c0_i32_1 = arith.constant 0 : i32
    return %c0_i32, %c0_i32_0 : i32, i32
  }
  func.func @transform_9(%arg0: i32) -> (i32, i32) {
    %c0_i32 = arith.constant 0 : i32
    %c0_i32_0 = arith.constant 0 : i32
    %c0_i32_1 = arith.constant 0 : i32
    return %c0_i32, %c0_i32_0 : i32, i32
  }
  func.func @transform_10(%arg0: i32) -> (i32, i32) {
    %c0_i32 = arith.constant 0 : i32
    %c0_i32_0 = arith.constant 0 : i32
    %c0_i32_1 = arith.constant 0 : i32
    return %c0_i32, %c0_i32_0 : i32, i32
  }
}

</mosaic_0001>

<llo_original>
// kernel: feature_regression_forward.1
$region0: #{feature_regression_forward.1}
  #allocation0 [shape = 'u32[]', space=smem, size = 0x4, offset = 0x4, fixed_abs, tag = 'smem constant byte address 0x4 - core index']
  #allocation1 [shape = 'u32[144,128]{1,0:T(1,128)}', space=vmem, size = 0x12000, scoped, tag = 'internal scratch']
  #allocation2 [shape = 'f32[50,32]{1,0:T(8,128)}', space=vmem, size = 0x7000, scoped, tag = 'scratch operand']
  #allocation3 [shape = 'f32[2,800]{1,0:T(2,128)}', space=vmem, size = 0x1c00, scoped, tag = 'scratch operand']
  %s0 = inlined_call_operand.vmem [shape: f32[50,512], index: 0, kind: input, shape index: {}]
  %s1 = inlined_call_operand.vmem [shape: f32[512,32], index: 1, kind: input, shape index: {}]
  %s2 = inlined_call_operand.vmem [shape: f32[1,32], index: 2, kind: input, shape index: {}]
  %s3 = inlined_call_operand.vmem [shape: f32[1,32], index: 3, kind: input, shape index: {}]
  %s4 = inlined_call_operand.vmem [shape: f32[800,256], index: 4, kind: input, shape index: {}]
  %s5 = inlined_call_operand.vmem [shape: f32[1,256], index: 5, kind: input, shape index: {}]
  %s6 = inlined_call_operand.vmem [shape: f32[256,128], index: 6, kind: input, shape index: {}]
  %s7 = inlined_call_operand.vmem [shape: f32[1,128], index: 7, kind: input, shape index: {}]
  %s8 = inlined_call_operand.vmem [shape: f32[128,128], index: 8, kind: input, shape index: {}]
  %s9 = inlined_call_operand.vmem [shape: f32[1,128], index: 9, kind: input, shape index: {}]
  %s10 = inlined_call_operand.hbm [shape: f32[2,128], index: 10, kind: output, shape index: {}]
  %s11 = sld [smem:[#allocation0]]
  $region50: #{feature_regression_forward.1} parent=0
    _
  %s13 = ssub.s32 1, %s11
  %s14 = scalar_select 0, %s13, %s11
  $region1: #{feature_regression_forward.1} parent=0
    #allocation4 [shape = 'u8[1024]{0}', space=vmem, size = 0x400, scoped, tag = 'output window, operand 0, single buffered']
    #allocation5 [shape = 's32[1]{0}', space=sflag, size = 0x4, scoped, tag = 'scoped memory for feature_regression_forward.1']
    %15 = vsyncpa [#allocation5], 0
    // Predicated region
    $region2: #{feature_regression_forward.1} parent=1 // pred_check
      _
    $region3: #{feature_regression_forward.1} parent=1 // pred_check_branch
      %17 = sbr.rel (0) target = $region5
    $region4: #{feature_regression_forward.1} parent=1 // pred_region
      _
    $region5: #{feature_regression_forward.1} parent=1 // pred_fallthru
      _
    // Predicated region
    $region6: #{feature_regression_forward.1} parent=1 // pred_check
      _
    $region7: #{feature_regression_forward.1} parent=1 // pred_check_branch
      %19 = sbr.rel (0) target = $region9
    $region8: #{feature_regression_forward.1} parent=1 // pred_region
      _
    $region9: #{feature_regression_forward.1} parent=1 // pred_fallthru
      _
    // Predicated region
    $region10: #{feature_regression_forward.1} parent=1 // pred_check
      _
    $region11: #{feature_regression_forward.1} parent=1 // pred_check_branch
      %21 = sbr.rel (0) target = $region13
    $region12: #{feature_regression_forward.1} parent=1 // pred_region
      _
    $region13: #{feature_regression_forward.1} parent=1 // pred_fallthru
      _
    // Predicated region
    $region14: #{feature_regression_forward.1} parent=1 // pred_check
      _
    $region15: #{feature_regression_forward.1} parent=1 // pred_check_branch
      %23 = sbr.rel (0) target = $region17
    $region16: #{feature_regression_forward.1} parent=1 // pred_region
      _
    $region17: #{feature_regression_forward.1} parent=1 // pred_fallthru
      _
    // Predicated region
    $region18: #{feature_regression_forward.1} parent=1 // pred_check
      _
    $region19: #{feature_regression_forward.1} parent=1 // pred_check_branch
      %25 = sbr.rel (0) target = $region21
    $region20: #{feature_regression_forward.1} parent=1 // pred_region
      _
    $region21: #{feature_regression_forward.1} parent=1 // pred_fallthru
      _
    // Predicated region
    $region22: #{feature_regression_forward.1} parent=1 // pred_check
      _
    $region23: #{feature_regression_forward.1} parent=1 // pred_check_branch
      %27 = sbr.rel (0) target = $region25
    $region24: #{feature_regression_forward.1} parent=1 // pred_region
      _
    $region25: #{feature_regression_forward.1} parent=1 // pred_fallthru
      _
    // Predicated region
    $region26: #{feature_regression_forward.1} parent=1 // pred_check
      _
    $region27: #{feature_regression_forward.1} parent=1 // pred_check_branch
      %29 = sbr.rel (0) target = $region29
    $region28: #{feature_regression_forward.1} parent=1 // pred_region
      _
    $region29: #{feature_regression_forward.1} parent=1 // pred_fallthru
      _
    // Predicated region
    $region30: #{feature_regression_forward.1} parent=1 // pred_check
      _
    $region31: #{feature_regression_forward.1} parent=1 // pred_check_branch
      %31 = sbr.rel (0) target = $region33
    $region32: #{feature_regression_forward.1} parent=1 // pred_region
      _
    $region33: #{feature_regression_forward.1} parent=1 // pred_fallthru
      _
    // Predicated region
    $region34: #{feature_regression_forward.1} parent=1 // pred_check
      _
    $region35: #{feature_regression_forward.1} parent=1 // pred_check_branch
      %33 = sbr.rel (0) target = $region37
    $region36: #{feature_regression_forward.1} parent=1 // pred_region
      _
    $region37: #{feature_regression_forward.1} parent=1 // pred_fallthru
      _
    // Predicated region
    $region38: #{feature_regression_forward.1} parent=1 // pred_check
      _
    $region39: #{feature_regression_forward.1} parent=1 // pred_check_branch
      %35 = sbr.rel (0) target = $region41
    $region40: #{feature_regression_forward.1} parent=1 // pred_region
      _
    $region41: #{feature_regression_forward.1} parent=1 // pred_fallthru
      _
    %v36 = vld [vmem:[%s0] sm:$0xff]
    %v37 = vld [vmem:[%s0 + $0x8] sm:$0xff]
    %v38 = vld [vmem:[%s0 + $0x10] sm:$0xff]
    %v39 = vld [vmem:[%s0 + $0x18] sm:$0xff]
    %v40 = vld [vmem:[%s0 + $0x20] sm:$0xff]
    %v41 = vld [vmem:[%s0 + $0x28] sm:$0xff]
    %v42 = vld [vmem:[%s0 + $0x30] sm:$0xff]
    %v43 = vld [vmem:[%s0 + $0x38] sm:$0xff]
    %v44 = vld [vmem:[%s0 + $0x40] sm:$0xff]
    %v45 = vld [vmem:[%s0 + $0x48] sm:$0xff]
    %v46 = vld [vmem:[%s0 + $0x50] sm:$0xff]
    %v47 = vld [vmem:[%s0 + $0x58] sm:$0xff]
    %v48 = vld [vmem:[%s0 + $0x60] sm:$0xff]
    %v49 = vld [vmem:[%s0 + $0x68] sm:$0xff]
    %v50 = vld [vmem:[%s0 + $0x70] sm:$0xff]
    %v51 = vld [vmem:[%s0 + $0x78] sm:$0xff]
    %v52 = vld [vmem:[%s0 + $0x80] sm:$0xff]
    %v53 = vld [vmem:[%s0 + $0x88] sm:$0xff]
    %v54 = vld [vmem:[%s0 + $0x90] sm:$0xff]
    %v55 = vld [vmem:[%s0 + $0x98] sm:$0xff]
    %v56 = vld [vmem:[%s0 + $0xa0] sm:$0xff]
    %v57 = vld [vmem:[%s0 + $0xa8] sm:$0xff]
    %v58 = vld [vmem:[%s0 + $0xb0] sm:$0xff]
    %v59 = vld [vmem:[%s0 + $0xb8] sm:$0xff]
    %v60 = vld [vmem:[%s0 + $0xc0] sm:$0x3]
    %v61 = vld [vmem:[%s0 + $0xc8] sm:$0x3]
    %v62 = vld [vmem:[%s0 + $0xd0] sm:$0x3]
    %v63 = vld [vmem:[%s0 + $0xd8] sm:$0x3]
    %v64 = vld [vmem:[%s1] sm:$0xff]
    %v65 = vld [vmem:[%s1 + $0x8] sm:$0xff]
    %v66 = vld [vmem:[%s1 + $0x10] sm:$0xff]
    %v67 = vld [vmem:[%s1 + $0x18] sm:$0xff]
    %v68 = vld [vmem:[%s1 + $0x20] sm:$0xff]
    %v69 = vld [vmem:[%s1 + $0x28] sm:$0xff]
    %v70 = vld [vmem:[%s1 + $0x30] sm:$0xff]
    %v71 = vld [vmem:[%s1 + $0x38] sm:$0xff]
    %v72 = vld [vmem:[%s1 + $0x40] sm:$0xff]
    %v73 = vld [vmem:[%s1 + $0x48] sm:$0xff]
    %v74 = vld [vmem:[%s1 + $0x50] sm:$0xff]
    %v75 = vld [vmem:[%s1 + $0x58] sm:$0xff]
    %v76 = vld [vmem:[%s1 + $0x60] sm:$0xff]
    %v77 = vld [vmem:[%s1 + $0x68] sm:$0xff]
    %v78 = vld [vmem:[%s1 + $0x70] sm:$0xff]
    %v79 = vld [vmem:[%s1 + $0x78] sm:$0xff]
    %v80 = vld [vmem:[%s1 + $0x80] sm:$0xff]
    %v81 = vld [vmem:[%s1 + $0x88] sm:$0xff]
    %v82 = vld [vmem:[%s1 + $0x90] sm:$0xff]
    %v83 = vld [vmem:[%s1 + $0x98] sm:$0xff]
    %v84 = vld [vmem:[%s1 + $0xa0] sm:$0xff]
    %v85 = vld [vmem:[%s1 + $0xa8] sm:$0xff]
    %v86 = vld [vmem:[%s1 + $0xb0] sm:$0xff]
    %v87 = vld [vmem:[%s1 + $0xb8] sm:$0xff]
    %v88 = vld [vmem:[%s1 + $0xc0] sm:$0xff]
    %v89 = vld [vmem:[%s1 + $0xc8] sm:$0xff]
    %v90 = vld [vmem:[%s1 + $0xd0] sm:$0xff]
    %v91 = vld [vmem:[%s1 + $0xd8] sm:$0xff]
    %v92 = vld [vmem:[%s1 + $0xe0] sm:$0xff]
    %v93 = vld [vmem:[%s1 + $0xe8] sm:$0xff]
    %v94 = vld [vmem:[%s1 + $0xf0] sm:$0xff]
    %v95 = vld [vmem:[%s1 + $0xf8] sm:$0xff]
    %v96 = vld [vmem:[%s1 + $0x100] sm:$0xff]
    %v97 = vld [vmem:[%s1 + $0x108] sm:$0xff]
    %v98 = vld [vmem:[%s1 + $0x110] sm:$0xff]
    %v99 = vld [vmem:[%s1 + $0x118] sm:$0xff]
    %v100 = vld [vmem:[%s1 + $0x120] sm:$0xff]
    %v101 = vld [vmem:[%s1 + $0x128] sm:$0xff]
    %v102 = vld [vmem:[%s1 + $0x130] sm:$0xff]
    %v103 = vld [vmem:[%s1 + $0x138] sm:$0xff]
    %v104 = vld [vmem:[%s1 + $0x140] sm:$0xff]
    %v105 = vld [vmem:[%s1 + $0x148] sm:$0xff]
    %v106 = vld [vmem:[%s1 + $0x150] sm:$0xff]
    %v107 = vld [vmem:[%s1 + $0x158] sm:$0xff]
    %v108 = vld [vmem:[%s1 + $0x160] sm:$0xff]
    %v109 = vld [vmem:[%s1 + $0x168] sm:$0xff]
    %v110 = vld [vmem:[%s1 + $0x170] sm:$0xff]
    %v111 = vld [vmem:[%s1 + $0x178] sm:$0xff]
    %v112 = vld [vmem:[%s1 + $0x180] sm:$0xff]
    %v113 = vld [vmem:[%s1 + $0x188] sm:$0xff]
    %v114 = vld [vmem:[%s1 + $0x190] sm:$0xff]
    %v115 = vld [vmem:[%s1 + $0x198] sm:$0xff]
    %v116 = vld [vmem:[%s1 + $0x1a0] sm:$0xff]
    %v117 = vld [vmem:[%s1 + $0x1a8] sm:$0xff]
    %v118 = vld [vmem:[%s1 + $0x1b0] sm:$0xff]
    %v119 = vld [vmem:[%s1 + $0x1b8] sm:$0xff]
    %v120 = vld [vmem:[%s1 + $0x1c0] sm:$0xff]
    %v121 = vld [vmem:[%s1 + $0x1c8] sm:$0xff]
    %v122 = vld [vmem:[%s1 + $0x1d0] sm:$0xff]
    %v123 = vld [vmem:[%s1 + $0x1d8] sm:$0xff]
    %v124 = vld [vmem:[%s1 + $0x1e0] sm:$0xff]
    %v125 = vld [vmem:[%s1 + $0x1e8] sm:$0xff]
    %v126 = vld [vmem:[%s1 + $0x1f0] sm:$0xff]
    %v127 = vld [vmem:[%s1 + $0x1f8] sm:$0xff]
    %128 = vmatprep.subr.mxu0 0.0
    %129 = vmatpush1.msra.mxu0 %v79
    %130 = vmatprep.subr.mxu0 0.0
    %131 = vmatpush1.msra.mxu0 %v78
    %132 = vmatprep.subr.mxu0 0.0
    %133 = vmatpush1.msra.mxu0 %v77
    %134 = vmatprep.subr.mxu0 0.0
    %135 = vmatpush1.msra.mxu0 %v76
    %136 = vmatprep.subr.mxu0 0.0
    %137 = vmatpush1.msra.mxu0 %v75
    %138 = vmatprep.subr.mxu0 0.0
    %139 = vmatpush1.msra.mxu0 %v74
    %140 = vmatprep.subr.mxu0 0.0
    %141 = vmatpush1.msra.mxu0 %v73
    %142 = vmatprep.subr.mxu0 0.0
    %143 = vmatpush1.msra.mxu0 %v72
    %144 = vmatprep.subr.mxu0 0.0
    %145 = vmatpush1.msra.mxu0 %v71
    %146 = vmatprep.subr.mxu0 0.0
    %147 = vmatpush1.msra.mxu0 %v70
    %148 = vmatprep.subr.mxu0 0.0
    %149 = vmatpush1.msra.mxu0 %v69
    %150 = vmatprep.subr.mxu0 0.0
    %151 = vmatpush1.msra.mxu0 %v68
    %152 = vmatprep.subr.mxu0 0.0
    %153 = vmatpush1.msra.mxu0 %v67
    %154 = vmatprep.subr.mxu0 0.0
    %155 = vmatpush1.msra.mxu0 %v66
    %156 = vmatprep.subr.mxu0 0.0
    %157 = vmatpush1.msra.mxu0 %v65
    %158 = vmatprep.subr.mxu0 0.0
    %159 = vmatpush1.msra.mxu0 %v64
    %160 = vmatprep.subr.mxu0 0.0
    %161 = vmatpush2.msra.mxu0 %v95
    %162 = vmatprep.subr.mxu0 0.0
    %163 = vmatpush2.msra.mxu0 %v94
    %164 = vmatprep.subr.mxu0 0.0
    %165 = vmatpush2.msra.mxu0 %v93
    %166 = vmatprep.subr.mxu0 0.0
    %167 = vmatpush2.msra.mxu0 %v92
    %168 = vmatprep.subr.mxu0 0.0
    %169 = vmatpush2.msra.mxu0 %v91
    %170 = vmatprep.subr.mxu0 0.0
    %171 = vmatpush2.msra.mxu0 %v90
    %172 = vmatprep.subr.mxu0 0.0
    %173 = vmatpush2.msra.mxu0 %v89
    %174 = vmatprep.subr.mxu0 0.0
    %175 = vmatpush2.msra.mxu0 %v88
    %176 = vmatprep.subr.mxu0 0.0
    %177 = vmatpush2.msra.mxu0 %v87
    %178 = vmatprep.subr.mxu0 0.0
    %179 = vmatpush2.msra.mxu0 %v86
    %180 = vmatprep.subr.mxu0 0.0
    %181 = vmatpush2.msra.mxu0 %v85
    %182 = vmatprep.subr.mxu0 0.0
    %183 = vmatpush2.msra.mxu0 %v84
    %184 = vmatprep.subr.mxu0 0.0
    %185 = vmatpush2.msra.mxu0 %v83
    %186 = vmatprep.subr.mxu0 0.0
    %187 = vmatpush2.msra.mxu0 %v82
    %188 = vmatprep.subr.mxu0 0.0
    %189 = vmatpush2.msra.mxu0 %v81
    %190 = vmatprep.subr.mxu0 0.0
    %191 = vmatpush2.msra.mxu0 %v80
    %192 = vmatprep.mubr.f32.mxu0 %v37
    %193 = vmatmul.mubr.f32.gmra.mxu0 %v36
    %v194 = vpop.f32.mrf.mxu0
    %v195 = vadd.f32 0.0, %v194
    %v196 = vpop.f32.mrf.mxu0
    %197 = vmatprep.mubr.f32.mxu0 %v41
    %198 = vmatmul.mubr.f32.gmra.mxu0 %v40
    %v199 = vpop.f32.mrf.mxu0
    %v200 = vadd.f32 0.0, %v199
    %v201 = vpop.f32.mrf.mxu0
    %202 = vmatprep.mubr.f32.mxu0 %v45
    %203 = vmatmul.mubr.f32.gmra.mxu0 %v44
    %v204 = vpop.f32.mrf.mxu0
    %v205 = vadd.f32 0.0, %v204
    %v206 = vpop.f32.mrf.mxu0
    %207 = vmatprep.mubr.f32.mxu0 %v49
    %208 = vmatmul.mubr.f32.gmra.mxu0 %v48
    %v209 = vpop.f32.mrf.mxu0
    %v210 = vadd.f32 0.0, %v209
    %v211 = vpop.f32.mrf.mxu0
    %212 = vmatprep.mubr.f32.mxu0 %v53
    %213 = vmatmul.mubr.f32.gmra.mxu0 %v52
    %v214 = vpop.f32.mrf.mxu0
    %v215 = vadd.f32 0.0, %v214
    %v216 = vpop.f32.mrf.mxu0
    %217 = vmatprep.mubr.f32.mxu0 %v57
    %218 = vmatmul.mubr.f32.gmra.mxu0 %v56
    %v219 = vpop.f32.mrf.mxu0
    %v220 = vadd.f32 0.0, %v219
    %v221 = vpop.f32.mrf.mxu0
    %222 = vmatprep.mubr.f32.mxu0 %v61
    %223 = vmatmul.mubr.f32.gmra.mxu0 %v60
    %v224 = vpop.f32.mrf.mxu0
    %v225 = vadd.f32 0.0, %v224
    %v226 = vpop.f32.mrf.mxu0
    %227 = vdwg.mxu0
    %228 = vmatprep.subr.mxu0 0.0
    %229 = vmatpush1.msra.mxu0 %v111
    %230 = vmatprep.subr.mxu0 0.0
    %231 = vmatpush1.msra.mxu0 %v110
    %232 = vmatprep.subr.mxu0 0.0
    %233 = vmatpush1.msra.mxu0 %v109
    %234 = vmatprep.subr.mxu0 0.0
    %235 = vmatpush1.msra.mxu0 %v108
    %236 = vmatprep.subr.mxu0 0.0
    %237 = vmatpush1.msra.mxu0 %v107
    %238 = vmatprep.subr.mxu0 0.0
    %239 = vmatpush1.msra.mxu0 %v106
    %240 = vmatprep.subr.mxu0 0.0
    %241 = vmatpush1.msra.mxu0 %v105
    %242 = vmatprep.subr.mxu0 0.0
    %243 = vmatpush1.msra.mxu0 %v104
    %244 = vmatprep.subr.mxu0 0.0
    %245 = vmatpush1.msra.mxu0 %v103
    %246 = vmatprep.subr.mxu0 0.0
    %247 = vmatpush1.msra.mxu0 %v102
    %248 = vmatprep.subr.mxu0 0.0
    %249 = vmatpush1.msra.mxu0 %v101
    %250 = vmatprep.subr.mxu0 0.0
    %251 = vmatpush1.msra.mxu0 %v100
    %252 = vmatprep.subr.mxu0 0.0
    %253 = vmatpush1.msra.mxu0 %v99
    %254 = vmatprep.subr.mxu0 0.0
    %255 = vmatpush1.msra.mxu0 %v98
    %256 = vmatprep.subr.mxu0 0.0
    %257 = vmatpush1.msra.mxu0 %v97
    %258 = vmatprep.subr.mxu0 0.0
    %259 = vmatpush1.msra.mxu0 %v96
    %260 = vmatprep.subr.mxu0 0.0
    %261 = vmatpush2.msra.mxu0 %v127
    %262 = vmatprep.subr.mxu0 0.0
    %263 = vmatpush2.msra.mxu0 %v126
    %264 = vmatprep.subr.mxu0 0.0
    %265 = vmatpush2.msra.mxu0 %v125
    %266 = vmatprep.subr.mxu0 0.0
    %267 = vmatpush2.msra.mxu0 %v124
    %268 = vmatprep.subr.mxu0 0.0
    %269 = vmatpush2.msra.mxu0 %v123
    %270 = vmatprep.subr.mxu0 0.0
    %271 = vmatpush2.msra.mxu0 %v122
    %272 = vmatprep.subr.mxu0 0.0
    %273 = vmatpush2.msra.mxu0 %v121
    %274 = vmatprep.subr.mxu0 0.0
    %275 = vmatpush2.msra.mxu0 %v120
    %276 = vmatprep.subr.mxu0 0.0
    %277 = vmatpush2.msra.mxu0 %v119
    %278 = vmatprep.subr.mxu0 0.0
    %279 = vmatpush2.msra.mxu0 %v118
    %280 = vmatprep.subr.mxu0 0.0
    %281 = vmatpush2.msra.mxu0 %v117
    %282 = vmatprep.subr.mxu0 0.0
    %283 = vmatpush2.msra.mxu0 %v116
    %284 = vmatprep.subr.mxu0 0.0
    %285 = vmatpush2.msra.mxu0 %v115
    %286 = vmatprep.subr.mxu0 0.0
    %287 = vmatpush2.msra.mxu0 %v114
    %288 = vmatprep.subr.mxu0 0.0
    %289 = vmatpush2.msra.mxu0 %v113
    %290 = vmatprep.subr.mxu0 0.0
    %291 = vmatpush2.msra.mxu0 %v112
    %292 = vmatprep.mubr.f32.mxu0 %v39
    %293 = vmatmul.mubr.f32.gmra.mxu0 %v38
    %v294 = vpop.f32.mrf.mxu0
    %v295 = vadd.f32 %v195, %v294
    %v296 = vpop.f32.mrf.mxu0
    %297 = vmatprep.mubr.f32.mxu0 %v43
    %298 = vmatmul.mubr.f32.gmra.mxu0 %v42
    %v299 = vpop.f32.mrf.mxu0
    %v300 = vadd.f32 %v200, %v299
    %v301 = vpop.f32.mrf.mxu0
    %302 = vmatprep.mubr.f32.mxu0 %v47
    %303 = vmatmul.mubr.f32.gmra.mxu0 %v46
    %v304 = vpop.f32.mrf.mxu0
    %v305 = vadd.f32 %v205, %v304
    %v306 = vpop.f32.mrf.mxu0
    %307 = vmatprep.mubr.f32.mxu0 %v51
    %308 = vmatmul.mubr.f32.gmra.mxu0 %v50
    %v309 = vpop.f32.mrf.mxu0
    %v310 = vadd.f32 %v210, %v309
    %v311 = vpop.f32.mrf.mxu0
    %312 = vmatprep.mubr.f32.mxu0 %v55
    %313 = vmatmul.mubr.f32.gmra.mxu0 %v54
    %v314 = vpop.f32.mrf.mxu0
    %v315 = vadd.f32 %v215, %v314
    %v316 = vpop.f32.mrf.mxu0
    %317 = vmatprep.mubr.f32.mxu0 %v59
    %318 = vmatmul.mubr.f32.gmra.mxu0 %v58
    %v319 = vpop.f32.mrf.mxu0
    %v320 = vadd.f32 %v220, %v319
    %v321 = vpop.f32.mrf.mxu0
    %322 = vmatprep.mubr.f32.mxu0 %v63
    %323 = vmatmul.mubr.f32.gmra.mxu0 %v62
    %v324 = vpop.f32.mrf.mxu0
    %v325 = vadd.f32 %v225, %v324
    %v326 = vpop.f32.mrf.mxu0
    %327 = vdwg.mxu0
    %vm328 = vcmask 261120
    %v329 = vsel %vm328, %v295, 0.0
    %v330 = vsel %vm328, %v300, 0.0
    %v331 = vadd.f32 %v329, %v330
    %v332 = vsel %vm328, %v305, 0.0
    %v333 = vadd.f32 %v331, %v332
    %v334 = vsel %vm328, %v310, 0.0
    %v335 = vadd.f32 %v333, %v334
    %v336 = vsel %vm328, %v315, 0.0
    %v337 = vadd.f32 %v335, %v336
    %v338 = vsel %vm328, %v320, 0.0
    %v339 = vadd.f32 %v337, %v338
    %vm340 = vcmask 254976
    %v341 = vsel %vm340, %v325, 0.0
    %v342 = vadd.f32 %v339, %v341
    %v343 = vrot.slane %v342, 4
    %v344 = vadd.f32 %v342, %v343
    %v345 = vrot.slane %v344, 2
    %v346 = vadd.f32 %v344, %v345
    %v347 = vrot.slane %v346, 1
    %v348 = vadd.f32 %v346, %v347
    %v349 = vmul.f32 %v348, 0.02
    %v350 = vmul.f32 %v295, %v295
    %v351 = vmul.f32 %v300, %v300
    %v352 = vmul.f32 %v305, %v305
    %v353 = vmul.f32 %v310, %v310
    %v354 = vmul.f32 %v315, %v315
    %v355 = vmul.f32 %v320, %v320
    %v356 = vmul.f32 %v325, %v325
    %v357 = vsel %vm328, %v350, 0.0
    %v358 = vsel %vm328, %v351, 0.0
    %v359 = vadd.f32 %v357, %v358
    %v360 = vsel %vm328, %v352, 0.0
    %v361 = vadd.f32 %v359, %v360
    %v362 = vsel %vm328, %v353, 0.0
    %v363 = vadd.f32 %v361, %v362
    %v364 = vsel %vm328, %v354, 0.0
    %v365 = vadd.f32 %v363, %v364
    %v366 = vsel %vm328, %v355, 0.0
    %v367 = vadd.f32 %v365, %v366
    %v368 = vsel %vm340, %v356, 0.0
    %v369 = vadd.f32 %v367, %v368
    %v370 = vrot.slane %v369, 4
    %v371 = vadd.f32 %v369, %v370
    %v372 = vrot.slane %v371, 2
    %v373 = vadd.f32 %v371, %v372
    %v374 = vrot.slane %v373, 1
    %v375 = vadd.f32 %v373, %v374
    %v376 = vmul.f32 %v375, 0.02
    %v377 = vmul.f32 %v349, %v349
    %v378 = vsub.f32 %v376, %v377
    %v379 = vmax.f32 %v378, 0.0
    %v380 = vld [vmem:[%s2] sm:$0x1]
    %v381 = vadd.f32 %v379, 1e-05
    %v382 = vrsqrt.pop %v381
    %v383 = vmul.f32 %v380, %v382
    %v384 = vld [vmem:[%s3] sm:$0x1]
    %v385 = vmul.f32 %v349, %v383
    %v386 = vsub.f32 %v384, %v385
    %v388 = vlaneseq
    %v389 = vshrl.u32 %v388, 7
    %v390 = vsub.s32 0, %v389
    %v391 = vrot.slane %v383, %v390
    %v393 = vmul.f32 %v295, %v391
    %v394 = vmul.f32 %v300, %v391
    %v395 = vmul.f32 %v305, %v391
    %v396 = vmul.f32 %v310, %v391
    %v397 = vmul.f32 %v315, %v391
    %v398 = vmul.f32 %v320, %v391
    %v399 = vmul.f32 %v325, %v391
    %v401 = vlaneseq
    %v402 = vshrl.u32 %v401, 7
    %v403 = vsub.s32 0, %v402
    %v404 = vrot.slane %v386, %v403
    %v406 = vadd.f32 %v393, %v404
    %v407 = vadd.f32 %v394, %v404
    %v408 = vadd.f32 %v395, %v404
    %v409 = vadd.f32 %v396, %v404
    %v410 = vadd.f32 %v397, %v404
    %v411 = vadd.f32 %v398, %v404
    %v412 = vadd.f32 %v399, %v404
    %v413 = vmax.f32 %v406, 0.0
    %v414 = vmax.f32 %v407, 0.0
    %v415 = vmax.f32 %v408, 0.0
    %v416 = vmax.f32 %v409, 0.0
    %v417 = vmax.f32 %v410, 0.0
    %v418 = vmax.f32 %v411, 0.0
    %v419 = vmax.f32 %v412, 0.0
    %420 = vst.msk [vmem:[#allocation2] sm:$0xff] %vm328, %v413
    %421 = vst.msk [vmem:[#allocation2 + $0x8] sm:$0xff] %vm328, %v414
    %422 = vst.msk [vmem:[#allocation2 + $0x10] sm:$0xff] %vm328, %v415
    %423 = vst.msk [vmem:[#allocation2 + $0x18] sm:$0xff] %vm328, %v416
    %424 = vst.msk [vmem:[#allocation2 + $0x20] sm:$0xff] %vm328, %v417
    %425 = vst.msk [vmem:[#allocation2 + $0x28] sm:$0xff] %vm328, %v418
    %426 = vst.msk [vmem:[#allocation2 + $0x30] sm:$0x3] %vm340, %v419
    %v427 = vld [vmem:[#allocation2] sm:$0x3]
    %428 = vst.msk [vmem:[#allocation3] sm:$0x3] %vm340, %v427
    %v429 = vld [vmem:[#allocation2 + $0x2] sm:$0x3]
    %v432 = vunpack.c.l.s4 1983009808
    %v433 = vunpack.c.0.s8 %v432
    %v434 = vlaneseq
    %v435 = vshrl.u32 %v434, 7
    %v436 = vsub.s32 %v433, %v435
    %v437 = vrot.slane %v429, %v436
    %438 = vrot.lane.b32.xlu0 %v437, 32
    %v439 = vpop.permute.xlu0 %438
    %vm441 = vcmask 517376
    %442 = vst.msk [vmem:[#allocation3] sm:$0x3] %vm441, %v439
    %v443 = vld [vmem:[#allocation2 + $0x4] sm:$0x3]
    %v446 = vunpack.c.l.s4 1983009808
    %v447 = vunpack.c.0.s8 %v446
    %v448 = vlaneseq
    %v449 = vshrl.u32 %v448, 7
    %v450 = vsub.s32 %v447, %v449
    %v451 = vrot.slane %v443, %v450
    %452 = vrot.lane.b32.xlu0 %v451, 64
    %v453 = vpop.permute.xlu0 %452
    %vm455 = vcmask 779776
    %456 = vst.msk [vmem:[#allocation3] sm:$0x3] %vm455, %v453
    %v457 = vld [vmem:[#allocation2 + $0x6] sm:$0x3]
    %v460 = vunpack.c.l.s4 1983009808
    %v461 = vunpack.c.0.s8 %v460
    %v462 = vlaneseq
    %v463 = vshrl.u32 %v462, 7
    %v464 = vsub.s32 %v461, %v463
    %v465 = vrot.slane %v457, %v464
    %466 = vrot.lane.b32.xlu0 %v465, 96
    %v467 = vpop.permute.xlu0 %466
    %vm469 = vcmask 1042176
    %470 = vst.msk [vmem:[#allocation3] sm:$0x3] %vm469, %v467
    %v471 = vld [vmem:[#allocation2 + $0x8] sm:$0x3]
    %472 = vst.msk [vmem:[#allocation3 + $0x2] sm:$0x3] %vm340, %v471
    %v473 = vld [vmem:[#allocation2 + $0xa] sm:$0x3]
    %v476 = vunpack.c.l.s4 1983009808
    %v477 = vunpack.c.0.s8 %v476
    %v478 = vlaneseq
    %v479 = vshrl.u32 %v478, 7
    %v480 = vsub.s32 %v477, %v479
    %v481 = vrot.slane %v473, %v480
    %482 = vrot.lane.b32.xlu0 %v481, 32
    %v483 = vpop.permute.xlu0 %482
    %485 = vst.msk [vmem:[#allocation3 + $0x2] sm:$0x3] %vm441, %v483
    %v486 = vld [vmem:[#allocation2 + $0xc] sm:$0x3]
    %v489 = vunpack.c.l.s4 1983009808
    %v490 = vunpack.c.0.s8 %v489
    %v491 = vlaneseq
    %v492 = vshrl.u32 %v491, 7
    %v493 = vsub.s32 %v490, %v492
    %v494 = vrot.slane %v486, %v493
    %495 = vrot.lane.b32.xlu0 %v494, 64
    %v496 = vpop.permute.xlu0 %495
    %498 = vst.msk [vmem:[#allocation3 + $0x2] sm:$0x3] %vm455, %v496
    %v499 = vld [vmem:[#allocation2 + $0xe] sm:$0x3]
    %v502 = vunpack.c.l.s4 1983009808
    %v503 = vunpack.c.0.s8 %v502
    %v504 = vlaneseq
    %v505 = vshrl.u32 %v504, 7
    %v506 = vsub.s32 %v503, %v505
    %v507 = vrot.slane %v499, %v506
    %508 = vrot.lane.b32.xlu0 %v507, 96
    %v509 = vpop.permute.xlu0 %508
    %511 = vst.msk [vmem:[#allocation3 + $0x2] sm:$0x3] %vm469, %v509
    %v512 = vld [vmem:[#allocation2 + $0x10] sm:$0x3]
    %513 = vst.msk [vmem:[#allocation3 + $0x4] sm:$0x3] %vm340, %v512
    %v514 = vld [vmem:[#allocation2 + $0x12] sm:$0x3]
    %v517 = vunpack.c.l.s4 1983009808
    %v518 = vunpack.c.0.s8 %v517
    %v519 = vlaneseq
    %v520 = vshrl.u32 %v519, 7
    %v521 = vsub.s32 %v518, %v520
    %v522 = vrot.slane %v514, %v521
    %523 = vrot.lane.b32.xlu0 %v522, 32
    %v524 = vpop.permute.xlu0 %523
    %526 = vst.msk [vmem:[#allocation3 + $0x4] sm:$0x3] %vm441, %v524
    %v527 = vld [vmem:[#allocation2 + $0x14] sm:$0x3]
    %v530 = vunpack.c.l.s4 1983009808
    %v531 = vunpack.c.0.s8 %v530
    %v532 = vlaneseq
    %v533 = vshrl.u32 %v532, 7
    %v534 = vsub.s32 %v531, %v533
    %v535 = vrot.slane %v527, %v534
    %536 = vrot.lane.b32.xlu0 %v535, 64
    %v537 = vpop.permute.xlu0 %536
    %539 = vst.msk [vmem:[#allocation3 + $0x4] sm:$0x3] %vm455, %v537
    %v540 = vld [vmem:[#allocation2 + $0x16] sm:$0x3]
    %v543 = vunpack.c.l.s4 1983009808
    %v544 = vunpack.c.0.s8 %v543
    %v545 = vlaneseq
    %v546 = vshrl.u32 %v545, 7
    %v547 = vsub.s32 %v544, %v546
    %v548 = vrot.slane %v540, %v547
    %549 = vrot.lane.b32.xlu0 %v548, 96
    %v550 = vpop.permute.xlu0 %549
    %552 = vst.msk [vmem:[#allocation3 + $0x4] sm:$0x3] %vm469, %v550
    %v553 = vld [vmem:[#allocation2 + $0x18] sm:$0x3]
    %554 = vst.msk [vmem:[#allocation3 + $0x6] sm:$0x3] %vm340, %v553
    %v555 = vld [vmem:[#allocation2 + $0x1a] sm:$0x3]
    %v558 = vunpack.c.l.s4 1983009808
    %v559 = vunpack.c.0.s8 %v558
    %v560 = vlaneseq
    %v561 = vshrl.u32 %v560, 7
    %v562 = vsub.s32 %v559, %v561
    %v563 = vrot.slane %v555, %v562
    %564 = vrot.lane.b32.xlu0 %v563, 32
    %v565 = vpop.permute.xlu0 %564
    %567 = vst.msk [vmem:[#allocation3 + $0x6] sm:$0x3] %vm441, %v565
    %v568 = vld [vmem:[#allocation2 + $0x1c] sm:$0x3]
    %v571 = vunpack.c.l.s4 1983009808
    %v572 = vunpack.c.0.s8 %v571
    %v573 = vlaneseq
    %v574 = vshrl.u32 %v573, 7
    %v575 = vsub.s32 %v572, %v574
    %v576 = vrot.slane %v568, %v575
    %577 = vrot.lane.b32.xlu0 %v576, 64
    %v578 = vpop.permute.xlu0 %577
    %580 = vst.msk [vmem:[#allocation3 + $0x6] sm:$0x3] %vm455, %v578
    %v581 = vld [vmem:[#allocation2 + $0x1e] sm:$0x3]
    %v584 = vunpack.c.l.s4 1983009808
    %v585 = vunpack.c.0.s8 %v584
    %v586 = vlaneseq
    %v587 = vshrl.u32 %v586, 7
    %v588 = vsub.s32 %v585, %v587
    %v589 = vrot.slane %v581, %v588
    %590 = vrot.lane.b32.xlu0 %v589, 96
    %v591 = vpop.permute.xlu0 %590
    %593 = vst.msk [vmem:[#allocation3 + $0x6] sm:$0x3] %vm469, %v591
    %v594 = vld [vmem:[#allocation2 + $0x20] sm:$0x3]
    %595 = vst.msk [vmem:[#allocation3 + $0x8] sm:$0x3] %vm340, %v594
    %v596 = vld [vmem:[#allocation2 + $0x22] sm:$0x3]
    %v599 = vunpack.c.l.s4 1983009808
    %v600 = vunpack.c.0.s8 %v599
    %v601 = vlaneseq
    %v602 = vshrl.u32 %v601, 7
    %v603 = vsub.s32 %v600, %v602
    %v604 = vrot.slane %v596, %v603
    %605 = vrot.lane.b32.xlu0 %v604, 32
    %v606 = vpop.permute.xlu0 %605
    %608 = vst.msk [vmem:[#allocation3 + $0x8] sm:$0x3] %vm441, %v606
    %v609 = vld [vmem:[#allocation2 + $0x24] sm:$0x3]
    %v612 = vunpack.c.l.s4 1983009808
    %v613 = vunpack.c.0.s8 %v612
    %v614 = vlaneseq
    %v615 = vshrl.u32 %v614, 7
    %v616 = vsub.s32 %v613, %v615
    %v617 = vrot.slane %v609, %v616
    %618 = vrot.lane.b32.xlu0 %v617, 64
    %v619 = vpop.permute.xlu0 %618
    %621 = vst.msk [vmem:[#allocation3 + $0x8] sm:$0x3] %vm455, %v619
    %v622 = vld [vmem:[#allocation2 + $0x26] sm:$0x3]
    %v625 = vunpack.c.l.s4 1983009808
    %v626 = vunpack.c.0.s8 %v625
    %v627 = vlaneseq
    %v628 = vshrl.u32 %v627, 7
    %v629 = vsub.s32 %v626, %v628
    %v630 = vrot.slane %v622, %v629
    %631 = vrot.lane.b32.xlu0 %v630, 96
    %v632 = vpop.permute.xlu0 %631
    %634 = vst.msk [vmem:[#allocation3 + $0x8] sm:$0x3] %vm469, %v632
    %v635 = vld [vmem:[#allocation2 + $0x28] sm:$0x3]
    %636 = vst.msk [vmem:[#allocation3 + $0xa] sm:$0x3] %vm340, %v635
    %v637 = vld [vmem:[#allocation2 + $0x2a] sm:$0x3]
    %v640 = vunpack.c.l.s4 1983009808
    %v641 = vunpack.c.0.s8 %v640
    %v642 = vlaneseq
    %v643 = vshrl.u32 %v642, 7
    %v644 = vsub.s32 %v641, %v643
    %v645 = vrot.slane %v637, %v644
    %646 = vrot.lane.b32.xlu0 %v645, 32
    %v647 = vpop.permute.xlu0 %646
    %649 = vst.msk [vmem:[#allocation3 + $0xa] sm:$0x3] %vm441, %v647
    %v650 = vld [vmem:[#allocation2 + $0x2c] sm:$0x3]
    %v653 = vunpack.c.l.s4 1983009808
    %v654 = vunpack.c.0.s8 %v653
    %v655 = vlaneseq
    %v656 = vshrl.u32 %v655, 7
    %v657 = vsub.s32 %v654, %v656
    %v658 = vrot.slane %v650, %v657
    %659 = vrot.lane.b32.xlu0 %v658, 64
    %v660 = vpop.permute.xlu0 %659
    %662 = vst.msk [vmem:[#allocation3 + $0xa] sm:$0x3] %vm455, %v660
    %v663 = vld [vmem:[#allocation2 + $0x2e] sm:$0x3]
    %v666 = vunpack.c.l.s4 1983009808
    %v667 = vunpack.c.0.s8 %v666
    %v668 = vlaneseq
    %v669 = vshrl.u32 %v668, 7
    %v670 = vsub.s32 %v667, %v669
    %v671 = vrot.slane %v663, %v670
    %672 = vrot.lane.b32.xlu0 %v671, 96
    %v673 = vpop.permute.xlu0 %672
    %675 = vst.msk [vmem:[#allocation3 + $0xa] sm:$0x3] %vm469, %v673
    %v676 = vld [vmem:[#allocation2 + $0x30] sm:$0x3]
    %677 = vst.msk [vmem:[#allocation3 + $0xc] sm:$0x3] %vm340, %v676
    %v678 = vld [vmem:[#allocation3] sm:$0xff]
    %v679 = vld [vmem:[#allocation3 + $0x8] sm:$0x3f]
    %v680 = vld [vmem:[%s4] sm:$0xff]
    %v681 = vld [vmem:[%s4 + $0x8] sm:$0xff]
    %v682 = vld [vmem:[%s4 + $0x10] sm:$0xff]
    %v683 = vld [vmem:[%s4 + $0x18] sm:$0xff]
    %v684 = vld [vmem:[%s4 + $0x20] sm:$0xff]
    %v685 = vld [vmem:[%s4 + $0x28] sm:$0xff]
    %v686 = vld [vmem:[%s4 + $0x30] sm:$0xff]
    %v687 = vld [vmem:[%s4 + $0x38] sm:$0xff]
    %v688 = vld [vmem:[%s4 + $0x40] sm:$0xff]
    %v689 = vld [vmem:[%s4 + $0x48] sm:$0xff]
    %v690 = vld [vmem:[%s4 + $0x50] sm:$0xff]
    %v691 = vld [vmem:[%s4 + $0x58] sm:$0xff]
    %v692 = vld [vmem:[%s4 + $0x60] sm:$0xff]
    %v693 = vld [vmem:[%s4 + $0x68] sm:$0xff]
    %v694 = vld [vmem:[%s4 + $0x70] sm:$0xff]
    %v695 = vld [vmem:[%s4 + $0x78] sm:$0xff]
    %v696 = vld [vmem:[%s4 + $0x80] sm:$0xff]
    %v697 = vld [vmem:[%s4 + $0x88] sm:$0xff]
    %v698 = vld [vmem:[%s4 + $0x90] sm:$0xff]
    %v699 = vld [vmem:[%s4 + $0x98] sm:$0xff]
    %v700 = vld [vmem:[%s4 + $0xa0] sm:$0xff]
    %v701 = vld [vmem:[%s4 + $0xa8] sm:$0xff]
    %v702 = vld [vmem:[%s4 + $0xb0] sm:$0xff]
    %v703 = vld [vmem:[%s4 + $0xb8] sm:$0xff]
    %v704 = vld [vmem:[%s4 + $0xc0] sm:$0xff]
    %v705 = vld [vmem:[%s4 + $0xc8] sm:$0xff]
    %v706 = vld [vmem:[%s4 + $0xd0] sm:$0xff]
    %v707 = vld [vmem:[%s4 + $0xd8] sm:$0xff]
    %v708 = vld [vmem:[%s4 + $0xe0] sm:$0xff]
    %v709 = vld [vmem:[%s4 + $0xe8] sm:$0xff]
    %v710 = vld [vmem:[%s4 + $0xf0] sm:$0xff]
    %v711 = vld [vmem:[%s4 + $0xf8] sm:$0xff]
    %v712 = vld [vmem:[%s4 + $0x100] sm:$0xff]
    %v713 = vld [vmem:[%s4 + $0x108] sm:$0xff]
    %v714 = vld [vmem:[%s4 + $0x110] sm:$0xff]
    %v715 = vld [vmem:[%s4 + $0x118] sm:$0xff]
    %v716 = vld [vmem:[%s4 + $0x120] sm:$0xff]
    %v717 = vld [vmem:[%s4 + $0x128] sm:$0xff]
    %v718 = vld [vmem:[%s4 + $0x130] sm:$0xff]
    %v719 = vld [vmem:[%s4 + $0x138] sm:$0xff]
    %v720 = vld [vmem:[%s4 + $0x140] sm:$0xff]
    %v721 = vld [vmem:[%s4 + $0x148] sm:$0xff]
    %v722 = vld [vmem:[%s4 + $0x150] sm:$0xff]
    %v723 = vld [vmem:[%s4 + $0x158] sm:$0xff]
    %v724 = vld [vmem:[%s4 + $0x160] sm:$0xff]
    %v725 = vld [vmem:[%s4 + $0x168] sm:$0xff]
    %v726 = vld [vmem:[%s4 + $0x170] sm:$0xff]
    %v727 = vld [vmem:[%s4 + $0x178] sm:$0xff]
    %v728 = vld [vmem:[%s4 + $0x180] sm:$0xff]
    %v729 = vld [vmem:[%s4 + $0x188] sm:$0xff]
    %v730 = vld [vmem:[%s4 + $0x190] sm:$0xff]
    %v731 = vld [vmem:[%s4 + $0x198] sm:$0xff]
    %v732 = vld [vmem:[%s4 + $0x1a0] sm:$0xff]
    %v733 = vld [vmem:[%s4 + $0x1a8] sm:$0xff]
    %v734 = vld [vmem:[%s4 + $0x1b0] sm:$0xff]
    %v735 = vld [vmem:[%s4 + $0x1b8] sm:$0xff]
    %v736 = vld [vmem:[%s4 + $0x1c0] sm:$0xff]
    %v737 = vld [vmem:[%s4 + $0x1c8] sm:$0xff]
    %v738 = vld [vmem:[%s4 + $0x1d0] sm:$0xff]
    %v739 = vld [vmem:[%s4 + $0x1d8] sm:$0xff]
    %v740 = vld [vmem:[%s4 + $0x1e0] sm:$0xff]
    %v741 = vld [vmem:[%s4 + $0x1e8] sm:$0xff]
    %v742 = vld [vmem:[%s4 + $0x1f0] sm:$0xff]
    %v743 = vld [vmem:[%s4 + $0x1f8] sm:$0xff]
    %v744 = vld [vmem:[%s4 + $0x200] sm:$0xff]
    %v745 = vld [vmem:[%s4 + $0x208] sm:$0xff]
    %v746 = vld [vmem:[%s4 + $0x210] sm:$0xff]
    %v747 = vld [vmem:[%s4 + $0x218] sm:$0xff]
    %v748 = vld [vmem:[%s4 + $0x220] sm:$0xff]
    %v749 = vld [vmem:[%s4 + $0x228] sm:$0xff]
    %v750 = vld [vmem:[%s4 + $0x230] sm:$0xff]
    %v751 = vld [vmem:[%s4 + $0x238] sm:$0xff]
    %v752 = vld [vmem:[%s4 + $0x240] sm:$0xff]
    %v753 = vld [vmem:[%s4 + $0x248] sm:$0xff]
    %v754 = vld [vmem:[%s4 + $0x250] sm:$0xff]
    %v755 = vld [vmem:[%s4 + $0x258] sm:$0xff]
    %v756 = vld [vmem:[%s4 + $0x260] sm:$0xff]
    %v757 = vld [vmem:[%s4 + $0x268] sm:$0xff]
    %v758 = vld [vmem:[%s4 + $0x270] sm:$0xff]
    %v759 = vld [vmem:[%s4 + $0x278] sm:$0xff]
    %v760 = vld [vmem:[%s4 + $0x280] sm:$0xff]
    %v761 = vld [vmem:[%s4 + $0x288] sm:$0xff]
    %v762 = vld [vmem:[%s4 + $0x290] sm:$0xff]
    %v763 = vld [vmem:[%s4 + $0x298] sm:$0xff]
    %v764 = vld [vmem:[%s4 + $0x2a0] sm:$0xff]
    %v765 = vld [vmem:[%s4 + $0x2a8] sm:$0xff]
    %v766 = vld [vmem:[%s4 + $0x2b0] sm:$0xff]
    %v767 = vld [vmem:[%s4 + $0x2b8] sm:$0xff]
    %v768 = vld [vmem:[%s4 + $0x2c0] sm:$0xff]
    %v769 = vld [vmem:[%s4 + $0x2c8] sm:$0xff]
    %v770 = vld [vmem:[%s4 + $0x2d0] sm:$0xff]
    %v771 = vld [vmem:[%s4 + $0x2d8] sm:$0xff]
    %v772 = vld [vmem:[%s4 + $0x2e0] sm:$0xff]
    %v773 = vld [vmem:[%s4 + $0x2e8] sm:$0xff]
    %v774 = vld [vmem:[%s4 + $0x2f0] sm:$0xff]
    %v775 = vld [vmem:[%s4 + $0x2f8] sm:$0xff]
    %v776 = vld [vmem:[%s4 + $0x300] sm:$0xff]
    %v777 = vld [vmem:[%s4 + $0x308] sm:$0xff]
    %v778 = vld [vmem:[%s4 + $0x310] sm:$0xff]
    %v779 = vld [vmem:[%s4 + $0x318] sm:$0xff]
    %v780 = vld [vmem:[%s4 + $0x320] sm:$0xff]
    %v781 = vld [vmem:[%s4 + $0x328] sm:$0xff]
    %v782 = vld [vmem:[%s4 + $0x330] sm:$0xff]
    %v783 = vld [vmem:[%s4 + $0x338] sm:$0xff]
    %v784 = vld [vmem:[%s4 + $0x340] sm:$0xff]
    %v785 = vld [vmem:[%s4 + $0x348] sm:$0xff]
    %v786 = vld [vmem:[%s4 + $0x350] sm:$0xff]
    %v787 = vld [vmem:[%s4 + $0x358] sm:$0xff]
    %v788 = vld [vmem:[%s4 + $0x360] sm:$0xff]
    %v789 = vld [vmem:[%s4 + $0x368] sm:$0xff]
    %v790 = vld [vmem:[%s4 + $0x370] sm:$0xff]
    %v791 = vld [vmem:[%s4 + $0x378] sm:$0xff]
    %v792 = vld [vmem:[%s4 + $0x380] sm:$0xff]
    %v793 = vld [vmem:[%s4 + $0x388] sm:$0xff]
    %v794 = vld [vmem:[%s4 + $0x390] sm:$0xff]
    %v795 = vld [vmem:[%s4 + $0x398] sm:$0xff]
    %v796 = vld [vmem:[%s4 + $0x3a0] sm:$0xff]
    %v797 = vld [vmem:[%s4 + $0x3a8] sm:$0xff]
    %v798 = vld [vmem:[%s4 + $0x3b0] sm:$0xff]
    %v799 = vld [vmem:[%s4 + $0x3b8] sm:$0xff]
    %v800 = vld [vmem:[%s4 + $0x3c0] sm:$0xff]
    %v801 = vld [vmem:[%s4 + $0x3c8] sm:$0xff]
    %v802 = vld [vmem:[%s4 + $0x3d0] sm:$0xff]
    %v803 = vld [vmem:[%s4 + $0x3d8] sm:$0xff]
    %v804 = vld [vmem:[%s4 + $0x3e0] sm:$0xff]
    %v805 = vld [vmem:[%s4 + $0x3e8] sm:$0xff]
    %v806 = vld [vmem:[%s4 + $0x3f0] sm:$0xff]
    %v807 = vld [vmem:[%s4 + $0x3f8] sm:$0xff]
    %v808 = vld [vmem:[%s4 + $0x400] sm:$0xff]
    %v809 = vld [vmem:[%s4 + $0x408] sm:$0xff]
    %v810 = vld [vmem:[%s4 + $0x410] sm:$0xff]
    %v811 = vld [vmem:[%s4 + $0x418] sm:$0xff]
    %v812 = vld [vmem:[%s4 + $0x420] sm:$0xff]
    %v813 = vld [vmem:[%s4 + $0x428] sm:$0xff]
    %v814 = vld [vmem:[%s4 + $0x430] sm:$0xff]
    %v815 = vld [vmem:[%s4 + $0x438] sm:$0xff]
    %v816 = vld [vmem:[%s4 + $0x440] sm:$0xff]
    %v817 = vld [vmem:[%s4 + $0x448] sm:$0xff]
    %v818 = vld [vmem:[%s4 + $0x450] sm:$0xff]
    %v819 = vld [vmem:[%s4 + $0x458] sm:$0xff]
    %v820 = vld [vmem:[%s4 + $0x460] sm:$0xff]
    %v821 = vld [vmem:[%s4 + $0x468] sm:$0xff]
    %v822 = vld [vmem:[%s4 + $0x470] sm:$0xff]
    %v823 = vld [vmem:[%s4 + $0x478] sm:$0xff]
    %v824 = vld [vmem:[%s4 + $0x480] sm:$0xff]
    %v825 = vld [vmem:[%s4 + $0x488] sm:$0xff]
    %v826 = vld [vmem:[%s4 + $0x490] sm:$0xff]
    %v827 = vld [vmem:[%s4 + $0x498] sm:$0xff]
    %v828 = vld [vmem:[%s4 + $0x4a0] sm:$0xff]
    %v829 = vld [vmem:[%s4 + $0x4a8] sm:$0xff]
    %v830 = vld [vmem:[%s4 + $0x4b0] sm:$0xff]
    %v831 = vld [vmem:[%s4 + $0x4b8] sm:$0xff]
    %v832 = vld [vmem:[%s4 + $0x4c0] sm:$0xff]
    %v833 = vld [vmem:[%s4 + $0x4c8] sm:$0xff]
    %v834 = vld [vmem:[%s4 + $0x4d0] sm:$0xff]
    %v835 = vld [vmem:[%s4 + $0x4d8] sm:$0xff]
    %v836 = vld [vmem:[%s4 + $0x4e0] sm:$0xff]
    %v837 = vld [vmem:[%s4 + $0x4e8] sm:$0xff]
    %v838 = vld [vmem:[%s4 + $0x4f0] sm:$0xff]
    %v839 = vld [vmem:[%s4 + $0x4f8] sm:$0xff]
    %v840 = vld [vmem:[%s4 + $0x500] sm:$0xff]
    %v841 = vld [vmem:[%s4 + $0x508] sm:$0xff]
    %v842 = vld [vmem:[%s4 + $0x510] sm:$0xff]
    %v843 = vld [vmem:[%s4 + $0x518] sm:$0xff]
    %v844 = vld [vmem:[%s4 + $0x520] sm:$0xff]
    %v845 = vld [vmem:[%s4 + $0x528] sm:$0xff]
    %v846 = vld [vmem:[%s4 + $0x530] sm:$0xff]
    %v847 = vld [vmem:[%s4 + $0x538] sm:$0xff]
    %v848 = vld [vmem:[%s4 + $0x540] sm:$0xff]
    %v849 = vld [vmem:[%s4 + $0x548] sm:$0xff]
    %v850 = vld [vmem:[%s4 + $0x550] sm:$0xff]
    %v851 = vld [vmem:[%s4 + $0x558] sm:$0xff]
    %v852 = vld [vmem:[%s4 + $0x560] sm:$0xff]
    %v853 = vld [vmem:[%s4 + $0x568] sm:$0xff]
    %v854 = vld [vmem:[%s4 + $0x570] sm:$0xff]
    %v855 = vld [vmem:[%s4 + $0x578] sm:$0xff]
    %v856 = vld [vmem:[%s4 + $0x580] sm:$0xff]
    %v857 = vld [vmem:[%s4 + $0x588] sm:$0xff]
    %v858 = vld [vmem:[%s4 + $0x590] sm:$0xff]
    %v859 = vld [vmem:[%s4 + $0x598] sm:$0xff]
    %v860 = vld [vmem:[%s4 + $0x5a0] sm:$0xff]
    %v861 = vld [vmem:[%s4 + $0x5a8] sm:$0xff]
    %v862 = vld [vmem:[%s4 + $0x5b0] sm:$0xff]
    %v863 = vld [vmem:[%s4 + $0x5b8] sm:$0xff]
    %v864 = vld [vmem:[%s4 + $0x5c0] sm:$0xff]
    %v865 = vld [vmem:[%s4 + $0x5c8] sm:$0xff]
    %v866 = vld [vmem:[%s4 + $0x5d0] sm:$0xff]
    %v867 = vld [vmem:[%s4 + $0x5d8] sm:$0xff]
    %v868 = vld [vmem:[%s4 + $0x5e0] sm:$0xff]
    %v869 = vld [vmem:[%s4 + $0x5e8] sm:$0xff]
    %v870 = vld [vmem:[%s4 + $0x5f0] sm:$0xff]
    %v871 = vld [vmem:[%s4 + $0x5f8] sm:$0xff]
    %v872 = vld [vmem:[%s4 + $0x600] sm:$0xff]
    %v873 = vld [vmem:[%s4 + $0x608] sm:$0xff]
    %v874 = vld [vmem:[%s4 + $0x610] sm:$0xff]
    %v875 = vld [vmem:[%s4 + $0x618] sm:$0xff]
    %v876 = vld [vmem:[%s4 + $0x620] sm:$0xff]
    %v877 = vld [vmem:[%s4 + $0x628] sm:$0xff]
    %v878 = vld [vmem:[%s4 + $0x630] sm:$0xff]
    %v879 = vld [vmem:[%s4 + $0x638] sm:$0xff]
    %v880 = vld [vmem:[%s5] sm:$0x3]
    %v882 = vlaneseq
    %v883 = vshrl.u32 %v882, 7
    %v884 = vsub.s32 0, %v883
    %v885 = vrot.slane %v880, %v884
    %v886 = vlaneseq
    %v887 = vshrl.u32 %v886, 7
    %v888 = vsub.s32 1, %v887
    %v889 = vrot.slane %v880, %v888
    %v894 = vcombine.high %v678, %v678
    %v896 = vunpack.c.l.s4 1983009808
    %v897 = vunpack.c.0.s8 %v896
    %v898 = vlaneseq
    %v899 = vshrl.u32 %v898, 7
    %v900 = vsub.s32 %v897, %v899
    %v901 = vrot.slane %v678, %v900
    %v903 = vunpack.c.l.s4 1983009808
    %v904 = vunpack.c.0.s8 %v903
    %v905 = vlaneseq
    %v906 = vshrl.u32 %v905, 7
    %v907 = vsub.s32 %v904, %v906
    %v908 = vrot.slane %v894, %v907
    %v909 = vcombine.high %v901, %v901
    %v910 = vcombine.high %v908, %v908
    %v911 = vcombine.high %v679, %v679
    %v913 = vunpack.c.l.s4 1983009808
    %v914 = vunpack.c.0.s8 %v913
    %v915 = vlaneseq
    %v916 = vshrl.u32 %v915, 7
    %v917 = vsub.s32 %v914, %v916
    %v918 = vrot.slane %v679, %v917
    %v920 = vunpack.c.l.s4 1983009808
    %v921 = vunpack.c.0.s8 %v920
    %v922 = vlaneseq
    %v923 = vshrl.u32 %v922, 7
    %v924 = vsub.s32 %v921, %v923
    %v925 = vrot.slane %v911, %v924
    %v926 = vcombine.high %v918, %v918
    %v933 = vsel %vm328, %v925, 0
    %935 = vmatprep.subr.mxu0 %v711
    %936 = vmatpush1.msra.mxu0 %v710
    %937 = vmatprep.subr.mxu0 %v709
    %938 = vmatpush1.msra.mxu0 %v708
    %939 = vmatprep.subr.mxu0 %v707
    %940 = vmatpush1.msra.mxu0 %v706
    %941 = vmatprep.subr.mxu0 %v705
    %942 = vmatpush1.msra.mxu0 %v704
    %943 = vmatprep.subr.mxu0 %v703
    %944 = vmatpush1.msra.mxu0 %v702
    %945 = vmatprep.subr.mxu0 %v701
    %946 = vmatpush1.msra.mxu0 %v700
    %947 = vmatprep.subr.mxu0 %v699
    %948 = vmatpush1.msra.mxu0 %v698
    %949 = vmatprep.subr.mxu0 %v697
    %950 = vmatpush1.msra.mxu0 %v696
    %951 = vmatprep.subr.mxu0 %v695
    %952 = vmatpush1.msra.mxu0 %v694
    %953 = vmatprep.subr.mxu0 %v693
    %954 = vmatpush1.msra.mxu0 %v692
    %955 = vmatprep.subr.mxu0 %v691
    %956 = vmatpush1.msra.mxu0 %v690
    %957 = vmatprep.subr.mxu0 %v689
    %958 = vmatpush1.msra.mxu0 %v688
    %959 = vmatprep.subr.mxu0 %v687
    %960 = vmatpush1.msra.mxu0 %v686
    %961 = vmatprep.subr.mxu0 %v685
    %962 = vmatpush1.msra.mxu0 %v684
    %963 = vmatprep.subr.mxu0 %v683
    %964 = vmatpush1.msra.mxu0 %v682
    %965 = vmatprep.subr.mxu0 %v681
    %966 = vmatpush1.msra.mxu0 %v680
    %967 = vmatprep.subr.mxu0 %v743
    %968 = vmatpush2.msra.mxu0 %v742
    %969 = vmatprep.subr.mxu0 %v741
    %970 = vmatpush2.msra.mxu0 %v740
    %971 = vmatprep.subr.mxu0 %v739
    %972 = vmatpush2.msra.mxu0 %v738
    %973 = vmatprep.subr.mxu0 %v737
    %974 = vmatpush2.msra.mxu0 %v736
    %975 = vmatprep.subr.mxu0 %v735
    %976 = vmatpush2.msra.mxu0 %v734
    %977 = vmatprep.subr.mxu0 %v733
    %978 = vmatpush2.msra.mxu0 %v732
    %979 = vmatprep.subr.mxu0 %v731
    %980 = vmatpush2.msra.mxu0 %v730
    %981 = vmatprep.subr.mxu0 %v729
    %982 = vmatpush2.msra.mxu0 %v728
    %983 = vmatprep.subr.mxu0 %v727
    %984 = vmatpush2.msra.mxu0 %v726
    %985 = vmatprep.subr.mxu0 %v725
    %986 = vmatpush2.msra.mxu0 %v724
    %987 = vmatprep.subr.mxu0 %v723
    %988 = vmatpush2.msra.mxu0 %v722
    %989 = vmatprep.subr.mxu0 %v721
    %990 = vmatpush2.msra.mxu0 %v720
    %991 = vmatprep.subr.mxu0 %v719
    %992 = vmatpush2.msra.mxu0 %v718
    %993 = vmatprep.subr.mxu0 %v717
    %994 = vmatpush2.msra.mxu0 %v716
    %995 = vmatprep.subr.mxu0 %v715
    %996 = vmatpush2.msra.mxu0 %v714
    %997 = vmatprep.subr.mxu0 %v713
    %998 = vmatpush2.msra.mxu0 %v712
    %999 = vmatprep.mubr.f32.mxu0 %v909
    %1000 = vmatmul.mubr.f32.gmra.mxu0 %v901
    %v1001 = vpop.f32.mrf.mxu0
    %v1002 = vadd.f32 %v885, %v1001
    %v1003 = vpop.f32.mrf.mxu0
    %v1004 = vadd.f32 %v889, %v1003
    %1005 = vdwg.mxu0
    %1006 = vmatprep.subr.mxu0 %v775
    %1007 = vmatpush1.msra.mxu0 %v774
    %1008 = vmatprep.subr.mxu0 %v773
    %1009 = vmatpush1.msra.mxu0 %v772
    %1010 = vmatprep.subr.mxu0 %v771
    %1011 = vmatpush1.msra.mxu0 %v770
    %1012 = vmatprep.subr.mxu0 %v769
    %1013 = vmatpush1.msra.mxu0 %v768
    %1014 = vmatprep.subr.mxu0 %v767
    %1015 = vmatpush1.msra.mxu0 %v766
    %1016 = vmatprep.subr.mxu0 %v765
    %1017 = vmatpush1.msra.mxu0 %v764
    %1018 = vmatprep.subr.mxu0 %v763
    %1019 = vmatpush1.msra.mxu0 %v762
    %1020 = vmatprep.subr.mxu0 %v761
    %1021 = vmatpush1.msra.mxu0 %v760
    %1022 = vmatprep.subr.mxu0 %v759
    %1023 = vmatpush1.msra.mxu0 %v758
    %1024 = vmatprep.subr.mxu0 %v757
    %1025 = vmatpush1.msra.mxu0 %v756
    %1026 = vmatprep.subr.mxu0 %v755
    %1027 = vmatpush1.msra.mxu0 %v754
    %1028 = vmatprep.subr.mxu0 %v753
    %1029 = vmatpush1.msra.mxu0 %v752
    %1030 = vmatprep.subr.mxu0 %v751
    %1031 = vmatpush1.msra.mxu0 %v750
    %1032 = vmatprep.subr.mxu0 %v749
    %1033 = vmatpush1.msra.mxu0 %v748
    %1034 = vmatprep.subr.mxu0 %v747
    %1035 = vmatpush1.msra.mxu0 %v746
    %1036 = vmatprep.subr.mxu0 %v745
    %1037 = vmatpush1.msra.mxu0 %v744
    %1038 = vmatprep.subr.mxu0 %v807
    %1039 = vmatpush2.msra.mxu0 %v806
    %1040 = vmatprep.subr.mxu0 %v805
    %1041 = vmatpush2.msra.mxu0 %v804
    %1042 = vmatprep.subr.mxu0 %v803
    %1043 = vmatpush2.msra.mxu0 %v802
    %1044 = vmatprep.subr.mxu0 %v801
    %1045 = vmatpush2.msra.mxu0 %v800
    %1046 = vmatprep.subr.mxu0 %v799
    %1047 = vmatpush2.msra.mxu0 %v798
    %1048 = vmatprep.subr.mxu0 %v797
    %1049 = vmatpush2.msra.mxu0 %v796
    %1050 = vmatprep.subr.mxu0 %v795
    %1051 = vmatpush2.msra.mxu0 %v794
    %1052 = vmatprep.subr.mxu0 %v793
    %1053 = vmatpush2.msra.mxu0 %v792
    %1054 = vmatprep.subr.mxu0 %v791
    %1055 = vmatpush2.msra.mxu0 %v790
    %1056 = vmatprep.subr.mxu0 %v789
    %1057 = vmatpush2.msra.mxu0 %v788
    %1058 = vmatprep.subr.mxu0 %v787
    %1059 = vmatpush2.msra.mxu0 %v786
    %1060 = vmatprep.subr.mxu0 %v785
    %1061 = vmatpush2.msra.mxu0 %v784
    %1062 = vmatprep.subr.mxu0 %v783
    %1063 = vmatpush2.msra.mxu0 %v782
    %1064 = vmatprep.subr.mxu0 %v781
    %1065 = vmatpush2.msra.mxu0 %v780
    %1066 = vmatprep.subr.mxu0 %v779
    %1067 = vmatpush2.msra.mxu0 %v778
    %1068 = vmatprep.subr.mxu0 %v777
    %1069 = vmatpush2.msra.mxu0 %v776
    %1070 = vmatprep.mubr.f32.mxu0 %v910
    %1071 = vmatmul.mubr.f32.gmra.mxu0 %v908
    %v1072 = vpop.f32.mrf.mxu0
    %v1073 = vadd.f32 %v1002, %v1072
    %v1074 = vpop.f32.mrf.mxu0
    %v1075 = vadd.f32 %v1004, %v1074
    %1076 = vdwg.mxu0
    %1077 = vmatprep.subr.mxu0 %v839
    %1078 = vmatpush1.msra.mxu0 %v838
    %1079 = vmatprep.subr.mxu0 %v837
    %1080 = vmatpush1.msra.mxu0 %v836
    %1081 = vmatprep.subr.mxu0 %v835
    %1082 = vmatpush1.msra.mxu0 %v834
    %1083 = vmatprep.subr.mxu0 %v833
    %1084 = vmatpush1.msra.mxu0 %v832
    %1085 = vmatprep.subr.mxu0 %v831
    %1086 = vmatpush1.msra.mxu0 %v830
    %1087 = vmatprep.subr.mxu0 %v829
    %1088 = vmatpush1.msra.mxu0 %v828
    %1089 = vmatprep.subr.mxu0 %v827
    %1090 = vmatpush1.msra.mxu0 %v826
    %1091 = vmatprep.subr.mxu0 %v825
    %1092 = vmatpush1.msra.mxu0 %v824
    %1093 = vmatprep.subr.mxu0 %v823
    %1094 = vmatpush1.msra.mxu0 %v822
    %1095 = vmatprep.subr.mxu0 %v821
    %1096 = vmatpush1.msra.mxu0 %v820
    %1097 = vmatprep.subr.mxu0 %v819
    %1098 = vmatpush1.msra.mxu0 %v818
    %1099 = vmatprep.subr.mxu0 %v817
    %1100 = vmatpush1.msra.mxu0 %v816
    %1101 = vmatprep.subr.mxu0 %v815
    %1102 = vmatpush1.msra.mxu0 %v814
    %1103 = vmatprep.subr.mxu0 %v813
    %1104 = vmatpush1.msra.mxu0 %v812
    %1105 = vmatprep.subr.mxu0 %v811
    %1106 = vmatpush1.msra.mxu0 %v810
    %1107 = vmatprep.subr.mxu0 %v809
    %1108 = vmatpush1.msra.mxu0 %v808
    %1109 = vmatprep.subr.mxu0 %v871
    %1110 = vmatpush2.msra.mxu0 %v870
    %1111 = vmatprep.subr.mxu0 %v869
    %1112 = vmatpush2.msra.mxu0 %v868
    %1113 = vmatprep.subr.mxu0 %v867
    %1114 = vmatpush2.msra.mxu0 %v866
    %1115 = vmatprep.subr.mxu0 %v865
    %1116 = vmatpush2.msra.mxu0 %v864
    %1117 = vmatprep.subr.mxu0 %v863
    %1118 = vmatpush2.msra.mxu0 %v862
    %1119 = vmatprep.subr.mxu0 %v861
    %1120 = vmatpush2.msra.mxu0 %v860
    %1121 = vmatprep.subr.mxu0 %v859
    %1122 = vmatpush2.msra.mxu0 %v858
    %1123 = vmatprep.subr.mxu0 %v857
    %1124 = vmatpush2.msra.mxu0 %v856
    %1125 = vmatprep.subr.mxu0 %v855
    %1126 = vmatpush2.msra.mxu0 %v854
    %1127 = vmatprep.subr.mxu0 %v853
    %1128 = vmatpush2.msra.mxu0 %v852
    %1129 = vmatprep.subr.mxu0 %v851
    %1130 = vmatpush2.msra.mxu0 %v850
    %1131 = vmatprep.subr.mxu0 %v849
    %1132 = vmatpush2.msra.mxu0 %v848
    %1133 = vmatprep.subr.mxu0 %v847
    %1134 = vmatpush2.msra.mxu0 %v846
    %1135 = vmatprep.subr.mxu0 %v845
    %1136 = vmatpush2.msra.mxu0 %v844
    %1137 = vmatprep.subr.mxu0 %v843
    %1138 = vmatpush2.msra.mxu0 %v842
    %1139 = vmatprep.subr.mxu0 %v841
    %1140 = vmatpush2.msra.mxu0 %v840
    %1141 = vmatprep.mubr.f32.mxu0 %v926
    %1142 = vmatmul.mubr.f32.gmra.mxu0 %v918
    %v1143 = vpop.f32.mrf.mxu0
    %v1144 = vadd.f32 %v1073, %v1143
    %v1145 = vpop.f32.mrf.mxu0
    %v1146 = vadd.f32 %v1075, %v1145
    %1147 = vdwg.mxu0
    %1148 = vmatprep.subr.mxu0 0.0
    %1149 = vmatpush1.msra.mxu0 0.0
    %1150 = vmatprep.subr.mxu0 0.0
    %1151 = vmatpush1.msra.mxu0 0.0
    %1152 = vmatprep.subr.mxu0 0.0
    %1153 = vmatpush1.msra.mxu0 0.0
    %1154 = vmatprep.subr.mxu0 0.0
    %1155 = vmatpush1.msra.mxu0 0.0
    %1156 = vmatprep.subr.mxu0 0.0
    %1157 = vmatpush1.msra.mxu0 0.0
    %1158 = vmatprep.subr.mxu0 0.0
    %1159 = vmatpush1.msra.mxu0 0.0
    %1160 = vmatprep.subr.mxu0 0.0
    %1161 = vmatpush1.msra.mxu0 0.0
    %1162 = vmatprep.subr.mxu0 0.0
    %1163 = vmatpush1.msra.mxu0 0.0
    %1164 = vmatprep.subr.mxu0 0.0
    %1165 = vmatpush1.msra.mxu0 0.0
    %1166 = vmatprep.subr.mxu0 0.0
    %1167 = vmatpush1.msra.mxu0 0.0
    %1168 = vmatprep.subr.mxu0 0.0
    %1169 = vmatpush1.msra.mxu0 0.0
    %1170 = vmatprep.subr.mxu0 0.0
    %1171 = vmatpush1.msra.mxu0 0.0
    %1172 = vmatprep.subr.mxu0 %v879
    %1173 = vmatpush1.msra.mxu0 %v878
    %1174 = vmatprep.subr.mxu0 %v877
    %1175 = vmatpush1.msra.mxu0 %v876
    %1176 = vmatprep.subr.mxu0 %v875
    %1177 = vmatpush1.msra.mxu0 %v874
    %1178 = vmatprep.subr.mxu0 %v873
    %1179 = vmatpush1.msra.mxu0 %v872
    %1180 = vmatprep.subr.mxu0 0.0
    %1181 = vmatpush2.msra.mxu0 0.0
    %1182 = vmatprep.subr.mxu0 0.0
    %1183 = vmatpush2.msra.mxu0 0.0
    %1184 = vmatprep.subr.mxu0 0.0
    %1185 = vmatpush2.msra.mxu0 0.0
    %1186 = vmatprep.subr.mxu0 0.0
    %1187 = vmatpush2.msra.mxu0 0.0
    %1188 = vmatprep.subr.mxu0 0.0
    %1189 = vmatpush2.msra.mxu0 0.0
    %1190 = vmatprep.subr.mxu0 0.0
    %1191 = vmatpush2.msra.mxu0 0.0
    %1192 = vmatprep.subr.mxu0 0.0
    %1193 = vmatpush2.msra.mxu0 0.0
    %1194 = vmatprep.subr.mxu0 0.0
    %1195 = vmatpush2.msra.mxu0 0.0
    %1196 = vmatprep.subr.mxu0 0.0
    %1197 = vmatpush2.msra.mxu0 0.0
    %1198 = vmatprep.subr.mxu0 0.0
    %1199 = vmatpush2.msra.mxu0 0.0
    %1200 = vmatprep.subr.mxu0 0.0
    %1201 = vmatpush2.msra.mxu0 0.0
    %1202 = vmatprep.subr.mxu0 0.0
    %1203 = vmatpush2.msra.mxu0 0.0
    %1204 = vmatprep.subr.mxu0 0.0
    %1205 = vmatpush2.msra.mxu0 0.0
    %1206 = vmatprep.subr.mxu0 0.0
    %1207 = vmatpush2.msra.mxu0 0.0
    %1208 = vmatprep.subr.mxu0 0.0
    %1209 = vmatpush2.msra.mxu0 0.0
    %1210 = vmatprep.subr.mxu0 0.0
    %1211 = vmatpush2.msra.mxu0 0.0
    %1212 = vmatprep.mubr.f32.mxu0 0.0
    %1213 = vmatmul.mubr.f32.gmra.mxu0 %v933
    %v1214 = vpop.f32.mrf.mxu0
    %v1215 = vadd.f32 %v1144, %v1214
    %v1216 = vpop.f32.mrf.mxu0
    %v1217 = vadd.f32 %v1146, %v1216
    %1218 = vdwg.mxu0
    %v1219 = vmax.f32 %v1215, 0.0
    %v1220 = vmax.f32 %v1217, 0.0
    %v1221 = vld [vmem:[%s6] sm:$0xff]
    %v1222 = vld [vmem:[%s6 + $0x8] sm:$0xff]
    %v1223 = vld [vmem:[%s6 + $0x10] sm:$0xff]
    %v1224 = vld [vmem:[%s6 + $0x18] sm:$0xff]
    %v1225 = vld [vmem:[%s6 + $0x20] sm:$0xff]
    %v1226 = vld [vmem:[%s6 + $0x28] sm:$0xff]
    %v1227 = vld [vmem:[%s6 + $0x30] sm:$0xff]
    %v1228 = vld [vmem:[%s6 + $0x38] sm:$0xff]
    %v1229 = vld [vmem:[%s6 + $0x40] sm:$0xff]
    %v1230 = vld [vmem:[%s6 + $0x48] sm:$0xff]
    %v1231 = vld [vmem:[%s6 + $0x50] sm:$0xff]
    %v1232 = vld [vmem:[%s6 + $0x58] sm:$0xff]
    %v1233 = vld [vmem:[%s6 + $0x60] sm:$0xff]
    %v1234 = vld [vmem:[%s6 + $0x68] sm:$0xff]
    %v1235 = vld [vmem:[%s6 + $0x70] sm:$0xff]
    %v1236 = vld [vmem:[%s6 + $0x78] sm:$0xff]
    %v1237 = vld [vmem:[%s6 + $0x80] sm:$0xff]
    %v1238 = vld [vmem:[%s6 + $0x88] sm:$0xff]
    %v1239 = vld [vmem:[%s6 + $0x90] sm:$0xff]
    %v1240 = vld [vmem:[%s6 + $0x98] sm:$0xff]
    %v1241 = vld [vmem:[%s6 + $0xa0] sm:$0xff]
    %v1242 = vld [vmem:[%s6 + $0xa8] sm:$0xff]
    %v1243 = vld [vmem:[%s6 + $0xb0] sm:$0xff]
    %v1244 = vld [vmem:[%s6 + $0xb8] sm:$0xff]
    %v1245 = vld [vmem:[%s6 + $0xc0] sm:$0xff]
    %v1246 = vld [vmem:[%s6 + $0xc8] sm:$0xff]
    %v1247 = vld [vmem:[%s6 + $0xd0] sm:$0xff]
    %v1248 = vld [vmem:[%s6 + $0xd8] sm:$0xff]
    %v1249 = vld [vmem:[%s6 + $0xe0] sm:$0xff]
    %v1250 = vld [vmem:[%s6 + $0xe8] sm:$0xff]
    %v1251 = vld [vmem:[%s6 + $0xf0] sm:$0xff]
    %v1252 = vld [vmem:[%s6 + $0xf8] sm:$0xff]
    %v1253 = vld [vmem:[%s7] sm:$0x1]
    %v1255 = vlaneseq
    %v1256 = vshrl.u32 %v1255, 7
    %v1257 = vsub.s32 0, %v1256
    %v1258 = vrot.slane %v1253, %v1257
    %1260 = vmatprep.subr.mxu0 0.0
    %1261 = vmatpush1.msra.mxu0 %v1236
    %1262 = vmatprep.subr.mxu0 0.0
    %1263 = vmatpush1.msra.mxu0 %v1235
    %1264 = vmatprep.subr.mxu0 0.0
    %1265 = vmatpush1.msra.mxu0 %v1234
    %1266 = vmatprep.subr.mxu0 0.0
    %1267 = vmatpush1.msra.mxu0 %v1233
    %1268 = vmatprep.subr.mxu0 0.0
    %1269 = vmatpush1.msra.mxu0 %v1232
    %1270 = vmatprep.subr.mxu0 0.0
    %1271 = vmatpush1.msra.mxu0 %v1231
    %1272 = vmatprep.subr.mxu0 0.0
    %1273 = vmatpush1.msra.mxu0 %v1230
    %1274 = vmatprep.subr.mxu0 0.0
    %1275 = vmatpush1.msra.mxu0 %v1229
    %1276 = vmatprep.subr.mxu0 0.0
    %1277 = vmatpush1.msra.mxu0 %v1228
    %1278 = vmatprep.subr.mxu0 0.0
    %1279 = vmatpush1.msra.mxu0 %v1227
    %1280 = vmatprep.subr.mxu0 0.0
    %1281 = vmatpush1.msra.mxu0 %v1226
    %1282 = vmatprep.subr.mxu0 0.0
    %1283 = vmatpush1.msra.mxu0 %v1225
    %1284 = vmatprep.subr.mxu0 0.0
    %1285 = vmatpush1.msra.mxu0 %v1224
    %1286 = vmatprep.subr.mxu0 0.0
    %1287 = vmatpush1.msra.mxu0 %v1223
    %1288 = vmatprep.subr.mxu0 0.0
    %1289 = vmatpush1.msra.mxu0 %v1222
    %1290 = vmatprep.subr.mxu0 0.0
    %1291 = vmatpush1.msra.mxu0 %v1221
    %1292 = vmatprep.subr.mxu0 0.0
    %1293 = vmatpush2.msra.mxu0 %v1252
    %1294 = vmatprep.subr.mxu0 0.0
    %1295 = vmatpush2.msra.mxu0 %v1251
    %1296 = vmatprep.subr.mxu0 0.0
    %1297 = vmatpush2.msra.mxu0 %v1250
    %1298 = vmatprep.subr.mxu0 0.0
    %1299 = vmatpush2.msra.mxu0 %v1249
    %1300 = vmatprep.subr.mxu0 0.0
    %1301 = vmatpush2.msra.mxu0 %v1248
    %1302 = vmatprep.subr.mxu0 0.0
    %1303 = vmatpush2.msra.mxu0 %v1247
    %1304 = vmatprep.subr.mxu0 0.0
    %1305 = vmatpush2.msra.mxu0 %v1246
    %1306 = vmatprep.subr.mxu0 0.0
    %1307 = vmatpush2.msra.mxu0 %v1245
    %1308 = vmatprep.subr.mxu0 0.0
    %1309 = vmatpush2.msra.mxu0 %v1244
    %1310 = vmatprep.subr.mxu0 0.0
    %1311 = vmatpush2.msra.mxu0 %v1243
    %1312 = vmatprep.subr.mxu0 0.0
    %1313 = vmatpush2.msra.mxu0 %v1242
    %1314 = vmatprep.subr.mxu0 0.0
    %1315 = vmatpush2.msra.mxu0 %v1241
    %1316 = vmatprep.subr.mxu0 0.0
    %1317 = vmatpush2.msra.mxu0 %v1240
    %1318 = vmatprep.subr.mxu0 0.0
    %1319 = vmatpush2.msra.mxu0 %v1239
    %1320 = vmatprep.subr.mxu0 0.0
    %1321 = vmatpush2.msra.mxu0 %v1238
    %1322 = vmatprep.subr.mxu0 0.0
    %1323 = vmatpush2.msra.mxu0 %v1237
    %1324 = vmatprep.mubr.f32.mxu0 %v1220
    %1325 = vmatmul.mubr.f32.gmra.mxu0 %v1219
    %v1326 = vpop.f32.mrf.mxu0
    %v1327 = vadd.f32 %v1258, %v1326
    %v1328 = vpop.f32.mrf.mxu0
    %1329 = vdwg.mxu0
    %v1330 = vmax.f32 %v1327, 0.0
    %v1331 = vld [vmem:[%s8] sm:$0xff]
    %v1332 = vld [vmem:[%s8 + $0x8] sm:$0xff]
    %v1333 = vld [vmem:[%s8 + $0x10] sm:$0xff]
    %v1334 = vld [vmem:[%s8 + $0x18] sm:$0xff]
    %v1335 = vld [vmem:[%s8 + $0x20] sm:$0xff]
    %v1336 = vld [vmem:[%s8 + $0x28] sm:$0xff]
    %v1337 = vld [vmem:[%s8 + $0x30] sm:$0xff]
    %v1338 = vld [vmem:[%s8 + $0x38] sm:$0xff]
    %v1339 = vld [vmem:[%s8 + $0x40] sm:$0xff]
    %v1340 = vld [vmem:[%s8 + $0x48] sm:$0xff]
    %v1341 = vld [vmem:[%s8 + $0x50] sm:$0xff]
    %v1342 = vld [vmem:[%s8 + $0x58] sm:$0xff]
    %v1343 = vld [vmem:[%s8 + $0x60] sm:$0xff]
    %v1344 = vld [vmem:[%s8 + $0x68] sm:$0xff]
    %v1345 = vld [vmem:[%s8 + $0x70] sm:$0xff]
    %v1346 = vld [vmem:[%s8 + $0x78] sm:$0xff]
    %v1347 = vld [vmem:[%s9] sm:$0x1]
    %v1349 = vlaneseq
    %v1350 = vshrl.u32 %v1349, 7
    %v1351 = vsub.s32 0, %v1350
    %v1352 = vrot.slane %v1347, %v1351
    %1354 = vmatprep.subr.mxu0 0.0
    %1355 = vmatpush1.msra.mxu0 %v1346
    %1356 = vmatprep.subr.mxu0 0.0
    %1357 = vmatpush1.msra.mxu0 %v1345
    %1358 = vmatprep.subr.mxu0 0.0
    %1359 = vmatpush1.msra.mxu0 %v1344
    %1360 = vmatprep.subr.mxu0 0.0
    %1361 = vmatpush1.msra.mxu0 %v1343
    %1362 = vmatprep.subr.mxu0 0.0
    %1363 = vmatpush1.msra.mxu0 %v1342
    %1364 = vmatprep.subr.mxu0 0.0
    %1365 = vmatpush1.msra.mxu0 %v1341
    %1366 = vmatprep.subr.mxu0 0.0
    %1367 = vmatpush1.msra.mxu0 %v1340
    %1368 = vmatprep.subr.mxu0 0.0
    %1369 = vmatpush1.msra.mxu0 %v1339
    %1370 = vmatprep.subr.mxu0 0.0
    %1371 = vmatpush1.msra.mxu0 %v1338
    %1372 = vmatprep.subr.mxu0 0.0
    %1373 = vmatpush1.msra.mxu0 %v1337
    %1374 = vmatprep.subr.mxu0 0.0
    %1375 = vmatpush1.msra.mxu0 %v1336
    %1376 = vmatprep.subr.mxu0 0.0
    %1377 = vmatpush1.msra.mxu0 %v1335
    %1378 = vmatprep.subr.mxu0 0.0
    %1379 = vmatpush1.msra.mxu0 %v1334
    %1380 = vmatprep.subr.mxu0 0.0
    %1381 = vmatpush1.msra.mxu0 %v1333
    %1382 = vmatprep.subr.mxu0 0.0
    %1383 = vmatpush1.msra.mxu0 %v1332
    %1384 = vmatprep.subr.mxu0 0.0
    %1385 = vmatpush1.msra.mxu0 %v1331
    %1386 = vmatprep.subr.mxu0 0.0
    %1387 = vmatpush2.msra.mxu0 0.0
    %1388 = vmatprep.subr.mxu0 0.0
    %1389 = vmatpush2.msra.mxu0 0.0
    %1390 = vmatprep.subr.mxu0 0.0
    %1391 = vmatpush2.msra.mxu0 0.0
    %1392 = vmatprep.subr.mxu0 0.0
    %1393 = vmatpush2.msra.mxu0 0.0
    %1394 = vmatprep.subr.mxu0 0.0
    %1395 = vmatpush2.msra.mxu0 0.0
    %1396 = vmatprep.subr.mxu0 0.0
    %1397 = vmatpush2.msra.mxu0 0.0
    %1398 = vmatprep.subr.mxu0 0.0
    %1399 = vmatpush2.msra.mxu0 0.0
    %1400 = vmatprep.subr.mxu0 0.0
    %1401 = vmatpush2.msra.mxu0 0.0
    %1402 = vmatprep.subr.mxu0 0.0
    %1403 = vmatpush2.msra.mxu0 0.0
    %1404 = vmatprep.subr.mxu0 0.0
    %1405 = vmatpush2.msra.mxu0 0.0
    %1406 = vmatprep.subr.mxu0 0.0
    %1407 = vmatpush2.msra.mxu0 0.0
    %1408 = vmatprep.subr.mxu0 0.0
    %1409 = vmatpush2.msra.mxu0 0.0
    %1410 = vmatprep.subr.mxu0 0.0
    %1411 = vmatpush2.msra.mxu0 0.0
    %1412 = vmatprep.subr.mxu0 0.0
    %1413 = vmatpush2.msra.mxu0 0.0
    %1414 = vmatprep.subr.mxu0 0.0
    %1415 = vmatpush2.msra.mxu0 0.0
    %1416 = vmatprep.subr.mxu0 0.0
    %1417 = vmatpush2.msra.mxu0 0.0
    %1418 = vmatprep.mubr.f32.mxu0 0.0
    %1419 = vmatmul.mubr.f32.gmra.mxu0 %v1330
    %v1420 = vpop.f32.mrf.mxu0
    %v1421 = vadd.f32 %v1352, %v1420
    %v1422 = vpop.f32.mrf.mxu0
    %1423 = vdwg.mxu0
    %v1424 = vmax.f32 %v1421, 0.0
    %1425 = vst [vmem:[#allocation4] sm:$0x3] %v1424
    // Predicated region
    $region42: #{feature_regression_forward.1} parent=1 // pred_check
      _
    $region43: #{feature_regression_forward.1} parent=1 // pred_check_branch
      %1427 = sbr.rel (0) target = $region45
    $region44: #{feature_regression_forward.1} parent=1 // pred_region
      %s1429 = ssub.s32 32, 32
      %1430 = vsyncadd [#allocation5], %s1429
      %s1432 = sshll.u32 [#allocation4], 4
      %s1433 = int_to_ptr.vmem [resolvable:$true] %s1432
      %1435 = dma.vmem_to_hbm [thread:$0]  %s1433, 32, %s10, [#allocation5]
    $region45: #{feature_regression_forward.1} parent=1 // pred_fallthru
      _
    // Predicated region
    $region46: #{feature_regression_forward.1} parent=1 // pred_check
      _
    $region47: #{feature_regression_forward.1} parent=1 // pred_check_branch
      %1437 = sbr.rel (0) target = $region49
    $region48: #{feature_regression_forward.1} parent=1 // pred_region
      %1438 = dma.done [#allocation5], 32
    $region49: #{feature_regression_forward.1} parent=1 // pred_fallthru
      _
    %1439 = vsyncpa [#allocation5], 1

</llo_original>
